<compile_context>
chip_gen: v7x
topology: tpu7x:2x2x1
jax: 0.10.0
libtpu: 0.0.40
codegen_flags: <defaults>
</compile_context>

<pallas_src>
import functools

import jax
import jax.numpy as jnp
from jax import lax
from jax.experimental import pallas as pl
from jax.experimental.pallas import tpu as pltpu

EPS = 1e-5
EXPANSION = 4
# 3x3 tap offsets, ky-major -> matches the (out, kh, kw, in) weight flattening below.
_TAPS = tuple((oy, ox) for oy in (-1, 0, 1) for ox in (-1, 0, 1))


def _bn_train(y, gamma, beta):
    """Training-mode BatchNorm over a (C, M) matrix, single pass (sum + sumsq)."""
    m = y.shape[1]
    s1 = jnp.sum(y, axis=1, keepdims=True)
    s2 = jnp.sum(y * y, axis=1, keepdims=True)
    mean = s1 * (1.0 / m)
    var = jnp.maximum(s2 * (1.0 / m) - mean * mean, 0.0)   # biased variance
    return (y - mean) * lax.rsqrt(var + EPS) * gamma + beta


def _bottleneck_kernel(x_ref, xs_ref, mask_ref, sel_ref,
                       w1_ref, w2_ref, w3_ref, ws_ref,
                       g1_ref, b1_ref, g2_ref, b2_ref, g3_ref, b3_ref,
                       gs_ref, bs_ref, rw_ref,
                       out_ref, ypad_ref,
                       *, N, H, W, P, stride, has_shortcut):
    f32 = jnp.float32
    bf16 = jnp.bfloat16
    NHW = N * H * W
    pad = W + 1   # halo so every tap offset oy*W + ox stays inside the flat buffer

    # ---- conv1 (1x1 PHConv == channel matmul, bf16 MXU / f32 acc) + BN1 + ReLU -----
    y1 = jnp.dot(w1_ref[...], x_ref[...], preferred_element_type=f32)        # (P, NHW)
    y1 = jnp.maximum(_bn_train(y1, g1_ref[...], b1_ref[...]), 0.0)

    # ---- flat zero-halo buffer: zero ONLY the halo strips, store the activation once
    ypad_ref[:, :pad] = jnp.zeros((P, pad), f32)
    ypad_ref[:, pad + NHW:] = jnp.zeros((P, pad), f32)
    ypad_ref[:, pad:pad + NHW] = y1

    # ---- conv2 (3x3, pad=1): fused im2col -> ONE MXU matmul with K = 9*P -----------
    wins = []
    for t, (oy, ox) in enumerate(_TAPS):
        start = pad + oy * W + ox
        win = ypad_ref[:, start:start + NHW]        # shifted window, static lane slice
        wins.append(win * mask_ref[t])              # zero taps that fall off the image
    slab = jnp.concatenate(wins, axis=0)            # (9P, NHW) f32
    if stride != 1:
        # TODO(synk): exact but wasteful at scale -- subsamples the stride-1 slab with a
        # 0/1 selection matmul instead of a strided window load.
        slab = jnp.dot(slab, sel_ref[...], preferred_element_type=f32)       # (9P, NHW2)
    y2 = jnp.dot(w2_ref[...], slab.astype(bf16), preferred_element_type=f32)  # (P, NHW2)
    y2 = jnp.maximum(_bn_train(y2, g2_ref[...], b2_ref[...]), 0.0)

    # ---- conv3 (1x1 PHConv) + BN3 (no ReLU before the rezero combine) --------------
    y3 = jnp.dot(w3_ref[...], y2.astype(bf16), preferred_element_type=f32)    # (4P, NHW2)
    y3 = _bn_train(y3, g3_ref[...], b3_ref[...])

    # ---- shortcut -------------------------------------------------------------------
    if has_shortcut:
        sc = jnp.dot(ws_ref[...], xs_ref[...], preferred_element_type=f32)    # (4P, NHW2)
        sc = _bn_train(sc, gs_ref[...], bs_ref[...])
    else:
        sc = xs_ref[...].astype(f32)                # identity (Cin == 4P and stride == 1)

    # ---- rezero combine: shortcut(x) + res_weight * relu(out) ----------------------
    out_ref[...] = sc + rw_ref[0, 0] * jnp.maximum(y3, 0.0)


# ---------------------------------------------------------------------------
# Parameter construction (deterministic, matching the shapes of __init__).
# ---------------------------------------------------------------------------
def _xavier_uniform(key, shape, fan_in, fan_out):
    bound = (6.0 / (fan_in + fan_out)) ** 0.5
    return jax.random.uniform(key, shape, jnp.float32, -bound, bound)


def ph_conv_weight(key, n, in_features, out_features, k):
    """PHConv weight = sum_i kron(A[i], F[i])  ->  (out, in, k, k)."""
    ka, kf = jax.random.split(key)
    A = _xavier_uniform(ka, (n, n, n), n * n, n * n)
    Fk = _xavier_uniform(kf, (n, out_features // n, in_features // n, k, k),
                         (in_features // n) * k * k, (out_features // n) * k * k)
    Wk = jnp.einsum('sab,spqhw->apbqhw', A, Fk)
    return Wk.reshape(out_features, in_features, k, k)


def init_bottleneck_params(key, n, in_planes, planes, stride, res_weight=0.25):
    exp_planes = EXPANSION * planes
    has_shortcut = (stride != 1) or (in_planes != exp_planes)
    k1, k2, k3, k4 = jax.random.split(key, 4)
    ones, zeros = (lambda c: jnp.ones((c,), jnp.float32)), (lambda c: jnp.zeros((c,), jnp.float32))
    params = {
        "W1": ph_conv_weight(k1, n, in_planes, planes, 1),
        "W2": ph_conv_weight(k2, n, planes, planes, 3),
        "W3": ph_conv_weight(k3, n, planes, exp_planes, 1),
        "g1": ones(planes), "b1": zeros(planes),
        "g2": ones(planes), "b2": zeros(planes),
        "g3": ones(exp_planes), "b3": zeros(exp_planes),
        # PyTorch inits res_weight to 0; use a nonzero value so the main path is exercised.
        "res_weight": jnp.full((1, 1), res_weight, jnp.float32),
        "has_shortcut": has_shortcut,
    }
    if has_shortcut:
        params["Ws"] = ph_conv_weight(k4, n, in_planes, exp_planes, 1)
    else:
        params["Ws"] = jnp.zeros((exp_planes, in_planes, 1, 1), jnp.float32)
    params["gs"], params["bs"] = ones(exp_planes), zeros(exp_planes)
    return params


# ---------------------------------------------------------------------------
# Pallas wrapper (NCHW in / NCHW out, like the PyTorch module).
# ---------------------------------------------------------------------------
def bottleneck_forward(x_nchw, params, *, stride):
    N, Cin, H, W = x_nchw.shape
    P = params["W1"].shape[0]
    C_out = EXPANSION * P
    H2 = (H + 2 - 3) // stride + 1
    W2 = (W + 2 - 3) // stride + 1
    NHW, NHW2 = N * H * W, N * H2 * W2
    has_shortcut = bool(params["has_shortcut"])
    if not has_shortcut:
        assert stride == 1 and Cin == C_out, "identity shortcut needs stride=1, Cin=4*planes"

    bf16, f32 = jnp.bfloat16, jnp.float32

    # lane-dense transposed activations: (channels, N*H*W), bf16 in HBM
    x_t = jnp.transpose(x_nchw, (1, 0, 2, 3)).reshape(Cin, NHW).astype(bf16)
    if stride == 1:
        xs_t = x_t
    else:
        xs = x_nchw[:, :, ::stride, ::stride]
        xs_t = jnp.transpose(xs, (1, 0, 2, 3)).reshape(Cin, NHW2).astype(bf16)

    # 9 halo-validity masks over the flat N*H*W axis (pure geometry, built once)
    ii = jnp.arange(H)[:, None]
    jj = jnp.arange(W)[None, :]
    m_rows = []
    for (oy, ox) in _TAPS:
        valid = ((ii + oy >= 0) & (ii + oy < H) & (jj + ox >= 0) & (jj + ox < W))
        m_rows.append(jnp.tile(valid.reshape(-1), (N,)).astype(f32))
    mask9 = jnp.stack(m_rows, axis=0).reshape(9, 1, NHW)

    # stride>1: 0/1 selection matrix picking the strided output pixels from the slab
    if stride != 1:
        n_i = jnp.arange(N)[:, None, None]
        i2 = jnp.arange(H2)[None, :, None]
        j2 = jnp.arange(W2)[None, None, :]
        flat_in = (n_i * (H * W) + (stride * i2) * W + stride * j2).reshape(-1)   # (NHW2,)
        sel = (jnp.arange(NHW)[:, None] == flat_in[None, :]).astype(f32)          # (NHW, NHW2)
    else:
        sel = jnp.zeros((8, 128), f32)   # unused dummy

    # PHConv weights flattened for the transposed matmuls (bf16 MXU operands)
    w1t = params["W1"][:, :, 0, 0].astype(bf16)                                    # (P, Cin)
    w2t = jnp.transpose(params["W2"], (0, 2, 3, 1)).reshape(P, 9 * P).astype(bf16)  # (P, 9P)
    w3t = params["W3"][:, :, 0, 0].astype(bf16)                                    # (4P, P)
    wst = params["Ws"][:, :, 0, 0].astype(bf16)                                    # (4P, Cin)
    col = lambda v: v.reshape(-1, 1).astype(f32)

    kernel = functools.partial(
        _bottleneck_kernel, N=N, H=H, W=W, P=P, stride=stride, has_shortcut=has_shortcut)

    vmem = pl.BlockSpec(memory_space=pltpu.MemorySpace.VMEM)
    smem = pl.BlockSpec(memory_space=pltpu.MemorySpace.SMEM)

    # TODO(synk): single-program (grid-less) kernel is fine at these toy sizes; real
    # ResNet shapes / v7x (64 MiB VMEM, 2 TCs) need a row-tiled grid with
    # dimension_semantics=("parallel", ...) and a two-pass (partial-sum) BatchNorm.
    out_t = pl.pallas_call(
        kernel,
        out_shape=jax.ShapeDtypeStruct((C_out, NHW2), f32),
        in_specs=[vmem] * 16 + [smem],
        out_specs=vmem,
        scratch_shapes=[pltpu.VMEM((P, NHW + 2 * (W + 1)), f32)],   # flat zero-halo buffer
        compiler_params=pltpu.CompilerParams(vmem_limit_bytes=32 * 1024 * 1024),
    )(x_t, xs_t, mask9, sel, w1t, w2t, w3t, wst,
      col(params["g1"]), col(params["b1"]),
      col(params["g2"]), col(params["b2"]),
      col(params["g3"]), col(params["b3"]),
      col(params["gs"]), col(params["bs"]),
      params["res_weight"])

    out = out_t.reshape(C_out, N, H2, W2)
    return jnp.transpose(out, (1, 0, 2, 3))


# ---------------------------------------------------------------------------
# Plain-JAX reference (for correctness checking only).
# ---------------------------------------------------------------------------
def bottleneck_reference(x_nchw, params, *, stride):
    hp = lax.Precision.HIGHEST

    def conv(x, W_oikk, s, pad):
        w = jnp.transpose(W_oikk, (2, 3, 1, 0))  # HWIO
        return lax.conv_general_dilated(
            x, w, (s, s), [(pad, pad), (pad, pad)],
            dimension_numbers=('NHWC', 'HWIO', 'NHWC'), precision=hp)

    def bn(y, g, b):
        mean = jnp.mean(y, axis=(0, 1, 2), keepdims=True)
        var = jnp.mean(jnp.square(y - mean), axis=(0, 1, 2), keepdims=True)
        return (y - mean) / jnp.sqrt(var + EPS) * g + b

    x = jnp.transpose(x_nchw, (0, 2, 3, 1)).astype(jnp.float32)
    out = jax.nn.relu(bn(conv(x, params["W1"], 1, 0), params["g1"], params["b1"]))
    out = jax.nn.relu(bn(conv(out, params["W2"], stride, 1), params["g2"], params["b2"]))
    out = bn(conv(out, params["W3"], 1, 0), params["g3"], params["b3"])
    if params["has_shortcut"]:
        sc = bn(conv(x, params["Ws"], stride, 0), params["gs"], params["bs"])
    else:
        sc = x
    out = sc + params["res_weight"][0, 0] * jax.nn.relu(out)
    return jnp.transpose(out, (0, 3, 1, 2))


if __name__ == "__main__":
    key = jax.random.PRNGKey(0)
    n, in_planes, planes = 4, 8, 8
    N, H, W = 2, 16, 16

    for stride in (1, 2):
        kx, kp = jax.random.split(jax.random.fold_in(key, stride))
        x = jax.random.normal(kx, (N, in_planes, H, W), jnp.float32)   # NCHW, like PyTorch
        params = init_bottleneck_params(kp, n, in_planes, planes, stride)

        out = jax.block_until_ready(bottleneck_forward(x, params, stride=stride))
        ref = bottleneck_reference(x, params, stride=stride)

        H2 = (H + 2 - 3) // stride + 1
        assert out.shape == (N, EXPANSION * planes, H2, H2), out.shape
        max_err = float(jnp.max(jnp.abs(out - ref)))
        if not bool(jnp.allclose(out, ref, atol=5e-2, rtol=5e-2)):
            raise AssertionError(
                f"stride={stride}: Pallas kernel mismatch vs reference (max |err| = {max_err})")
    print("KERNEL_OK")
</pallas_src>

<mosaic_0001>
module attributes {stable_mosaic.version = 11 : i64} {
  func.func @_bottleneck_kernel(%arg0: memref<8x512xbf16, #tpu.memory_space<vmem>>, %arg1: memref<8x512xbf16, #tpu.memory_space<vmem>>, %arg2: memref<9x1x512xf32, #tpu.memory_space<vmem>>, %arg3: memref<8x128xf32, #tpu.memory_space<vmem>>, %arg4: memref<8x8xbf16, #tpu.memory_space<vmem>>, %arg5: memref<8x72xbf16, #tpu.memory_space<vmem>>, %arg6: memref<32x8xbf16, #tpu.memory_space<vmem>>, %arg7: memref<32x8xbf16, #tpu.memory_space<vmem>>, %arg8: memref<8x1xf32, #tpu.memory_space<vmem>>, %arg9: memref<8x1xf32, #tpu.memory_space<vmem>>, %arg10: memref<8x1xf32, #tpu.memory_space<vmem>>, %arg11: memref<8x1xf32, #tpu.memory_space<vmem>>, %arg12: memref<32x1xf32, #tpu.memory_space<vmem>>, %arg13: memref<32x1xf32, #tpu.memory_space<vmem>>, %arg14: memref<32x1xf32, #tpu.memory_space<vmem>>, %arg15: memref<32x1xf32, #tpu.memory_space<vmem>>, %arg16: memref<1x1xf32, #tpu.memory_space<smem>>, %arg17: memref<32x512xf32, #tpu.memory_space<vmem>>, %arg18: memref<8x546xf32, #tpu.memory_space<vmem>>) attributes {dimension_semantics = [], scalar_prefetch = 0 : i64, scratch_operands = 1 : i64, tpu.core_type = #tpu.core_type<tc>} {
    %c0 = arith.constant 0 : index
    %c0_0 = arith.constant 0 : index
    %0 = vector.load %arg4[%c0, %c0_0] : memref<8x8xbf16, #tpu.memory_space<vmem>>, vector<8x8xbf16>
    %c0_1 = arith.constant 0 : index
    %c0_2 = arith.constant 0 : index
    %1 = vector.load %arg0[%c0_1, %c0_2] : memref<8x512xbf16, #tpu.memory_space<vmem>>, vector<8x512xbf16>
    %cst = arith.constant dense<0.000000e+00> : vector<8x512xf32>
    %2 = tpu.matmul %0, %1, %cst {dimension_numbers = #tpu.dot_dimension_numbers<[1], [0], [0], [1], [0, 0, 1, 1], [], []>} : vector<8x8xbf16>, vector<8x512xbf16>, vector<8x512xf32> -> vector<8x512xf32>
    %c0_3 = arith.constant 0 : index
    %c0_4 = arith.constant 0 : index
    %3 = vector.load %arg8[%c0_3, %c0_4] : memref<8x1xf32, #tpu.memory_space<vmem>>, vector<8x1xf32>
    %c0_5 = arith.constant 0 : index
    %c0_6 = arith.constant 0 : index
    %4 = vector.load %arg9[%c0_5, %c0_6] : memref<8x1xf32, #tpu.memory_space<vmem>>, vector<8x1xf32>
    %cst_7 = arith.constant dense<0.000000e+00> : vector<8xf32>
    %5 = vector.multi_reduction <add>, %2, %cst_7 [1] : vector<8x512xf32> to vector<8xf32>
    %6 = vector.shape_cast %5 : vector<8xf32> to vector<8x1xf32>
    %7 = arith.mulf %2, %2 : vector<8x512xf32>
    %cst_8 = arith.constant dense<0.000000e+00> : vector<8xf32>
    %8 = vector.multi_reduction <add>, %7, %cst_8 [1] : vector<8x512xf32> to vector<8xf32>
    %9 = vector.shape_cast %8 : vector<8xf32> to vector<8x1xf32>
    %cst_9 = arith.constant 0.001953125 : f32
    %10 = vector.broadcast %cst_9 : f32 to vector<8x1xf32>
    %11 = arith.mulf %6, %10 : vector<8x1xf32>
    %cst_10 = arith.constant 0.001953125 : f32
    %12 = vector.broadcast %cst_10 : f32 to vector<8x1xf32>
    %13 = arith.mulf %9, %12 : vector<8x1xf32>
    %14 = arith.mulf %11, %11 : vector<8x1xf32>
    %15 = arith.subf %13, %14 : vector<8x1xf32>
    %cst_11 = arith.constant 0.000000e+00 : f32
    %16 = vector.broadcast %cst_11 : f32 to vector<8x1xf32>
    %17 = arith.maximumf %15, %16 : vector<8x1xf32>
    %18 = vector.broadcast %11 : vector<8x1xf32> to vector<8x512xf32>
    %19 = arith.subf %2, %18 : vector<8x512xf32>
    %cst_12 = arith.constant 9.99999974E-6 : f32
    %20 = vector.broadcast %cst_12 : f32 to vector<8x1xf32>
    %21 = arith.addf %17, %20 : vector<8x1xf32>
    %22 = math.rsqrt %21 : vector<8x1xf32>
    %23 = vector.broadcast %22 : vector<8x1xf32> to vector<8x512xf32>
    %24 = arith.mulf %19, %23 : vector<8x512xf32>
    %25 = vector.broadcast %3 : vector<8x1xf32> to vector<8x512xf32>
    %26 = arith.mulf %24, %25 : vector<8x512xf32>
    %27 = vector.broadcast %4 : vector<8x1xf32> to vector<8x512xf32>
    %28 = arith.addf %26, %27 : vector<8x512xf32>
    %cst_13 = arith.constant 0.000000e+00 : f32
    %29 = vector.broadcast %cst_13 : f32 to vector<8x512xf32>
    %30 = arith.maximumf %28, %29 : vector<8x512xf32>
    %cst_14 = arith.constant 0.000000e+00 : f32
    %31 = vector.broadcast %cst_14 : f32 to vector<8x17xf32>
    %c0_15 = arith.constant 0 : index
    %c0_16 = arith.constant 0 : index
    %32 = vector.load %arg18[%c0_15, %c0_16] : memref<8x546xf32, #tpu.memory_space<vmem>>, vector<8x17xf32>
    tpu.vector_store %arg18[%c0_15, %c0_16], %31 {strides = array<i32>} : memref<8x546xf32, #tpu.memory_space<vmem>>, vector<8x17xf32>,
    %cst_17 = arith.constant 0.000000e+00 : f32
    %33 = vector.broadcast %cst_17 : f32 to vector<8x17xf32>
    %c0_18 = arith.constant 0 : index
    %c529 = arith.constant 529 : index
    %34 = vector.load %arg18[%c0_18, %c529] : memref<8x546xf32, #tpu.memory_space<vmem>>, vector<8x17xf32>
    tpu.vector_store %arg18[%c0_18, %c529], %33 {strides = array<i32>} : memref<8x546xf32, #tpu.memory_space<vmem>>, vector<8x17xf32>,
    %c0_19 = arith.constant 0 : index
    %c17 = arith.constant 17 : index
    %35 = vector.load %arg18[%c0_19, %c17] : memref<8x546xf32, #tpu.memory_space<vmem>>, vector<8x512xf32>
    tpu.vector_store %arg18[%c0_19, %c17], %30 {strides = array<i32>} : memref<8x546xf32, #tpu.memory_space<vmem>>, vector<8x512xf32>,
    %c0_20 = arith.constant 0 : index
    %c0_21 = arith.constant 0 : index
    %36 = vector.load %arg18[%c0_20, %c0_21] : memref<8x546xf32, #tpu.memory_space<vmem>>, vector<8x512xf32>
    %c0_22 = arith.constant 0 : index
    %c0_23 = arith.constant 0 : index
    %c0_24 = arith.constant 0 : index
    %37 = vector.load %arg2[%c0_22, %c0_23, %c0_24] : memref<9x1x512xf32, #tpu.memory_space<vmem>>, vector<1x1x512xf32>
    %38 = vector.shape_cast %37 : vector<1x1x512xf32> to vector<1x512xf32>
    %39 = vector.broadcast %38 : vector<1x512xf32> to vector<8x512xf32>
    %40 = arith.mulf %36, %39 : vector<8x512xf32>
    %c0_25 = arith.constant 0 : index
    %c1 = arith.constant 1 : index
    %41 = vector.load %arg18[%c0_25, %c1] : memref<8x546xf32, #tpu.memory_space<vmem>>, vector<8x512xf32>
    %c1_26 = arith.constant 1 : index
    %c0_27 = arith.constant 0 : index
    %c0_28 = arith.constant 0 : index
    %42 = vector.load %arg2[%c1_26, %c0_27, %c0_28] : memref<9x1x512xf32, #tpu.memory_space<vmem>>, vector<1x1x512xf32>
    %43 = vector.shape_cast %42 : vector<1x1x512xf32> to vector<1x512xf32>
    %44 = vector.broadcast %43 : vector<1x512xf32> to vector<8x512xf32>
    %45 = arith.mulf %41, %44 : vector<8x512xf32>
    %c0_29 = arith.constant 0 : index
    %c2 = arith.constant 2 : index
    %46 = vector.load %arg18[%c0_29, %c2] : memref<8x546xf32, #tpu.memory_space<vmem>>, vector<8x512xf32>
    %c2_30 = arith.constant 2 : index
    %c0_31 = arith.constant 0 : index
    %c0_32 = arith.constant 0 : index
    %47 = vector.load %arg2[%c2_30, %c0_31, %c0_32] : memref<9x1x512xf32, #tpu.memory_space<vmem>>, vector<1x1x512xf32>
    %48 = vector.shape_cast %47 : vector<1x1x512xf32> to vector<1x512xf32>
    %49 = vector.broadcast %48 : vector<1x512xf32> to vector<8x512xf32>
    %50 = arith.mulf %46, %49 : vector<8x512xf32>
    %c0_33 = arith.constant 0 : index
    %c16 = arith.constant 16 : index
    %51 = vector.load %arg18[%c0_33, %c16] : memref<8x546xf32, #tpu.memory_space<vmem>>, vector<8x512xf32>
    %c3 = arith.constant 3 : index
    %c0_34 = arith.constant 0 : index
    %c0_35 = arith.constant 0 : index
    %52 = vector.load %arg2[%c3, %c0_34, %c0_35] : memref<9x1x512xf32, #tpu.memory_space<vmem>>, vector<1x1x512xf32>
    %53 = vector.shape_cast %52 : vector<1x1x512xf32> to vector<1x512xf32>
    %54 = vector.broadcast %53 : vector<1x512xf32> to vector<8x512xf32>
    %55 = arith.mulf %51, %54 : vector<8x512xf32>
    %c0_36 = arith.constant 0 : index
    %c17_37 = arith.constant 17 : index
    %56 = vector.load %arg18[%c0_36, %c17_37] : memref<8x546xf32, #tpu.memory_space<vmem>>, vector<8x512xf32>
    %c4 = arith.constant 4 : index
    %c0_38 = arith.constant 0 : index
    %c0_39 = arith.constant 0 : index
    %57 = vector.load %arg2[%c4, %c0_38, %c0_39] : memref<9x1x512xf32, #tpu.memory_space<vmem>>, vector<1x1x512xf32>
    %58 = vector.shape_cast %57 : vector<1x1x512xf32> to vector<1x512xf32>
    %59 = vector.broadcast %58 : vector<1x512xf32> to vector<8x512xf32>
    %60 = arith.mulf %56, %59 : vector<8x512xf32>
    %c0_40 = arith.constant 0 : index
    %c18 = arith.constant 18 : index
    %61 = vector.load %arg18[%c0_40, %c18] : memref<8x546xf32, #tpu.memory_space<vmem>>, vector<8x512xf32>
    %c5 = arith.constant 5 : index
    %c0_41 = arith.constant 0 : index
    %c0_42 = arith.constant 0 : index
    %62 = vector.load %arg2[%c5, %c0_41, %c0_42] : memref<9x1x512xf32, #tpu.memory_space<vmem>>, vector<1x1x512xf32>
    %63 = vector.shape_cast %62 : vector<1x1x512xf32> to vector<1x512xf32>
    %64 = vector.broadcast %63 : vector<1x512xf32> to vector<8x512xf32>
    %65 = arith.mulf %61, %64 : vector<8x512xf32>
    %c0_43 = arith.constant 0 : index
    %c32 = arith.constant 32 : index
    %66 = vector.load %arg18[%c0_43, %c32] : memref<8x546xf32, #tpu.memory_space<vmem>>, vector<8x512xf32>
    %c6 = arith.constant 6 : index
    %c0_44 = arith.constant 0 : index
    %c0_45 = arith.constant 0 : index
    %67 = vector.load %arg2[%c6, %c0_44, %c0_45] : memref<9x1x512xf32, #tpu.memory_space<vmem>>, vector<1x1x512xf32>
    %68 = vector.shape_cast %67 : vector<1x1x512xf32> to vector<1x512xf32>
    %69 = vector.broadcast %68 : vector<1x512xf32> to vector<8x512xf32>
    %70 = arith.mulf %66, %69 : vector<8x512xf32>
    %c0_46 = arith.constant 0 : index
    %c33 = arith.constant 33 : index
    %71 = vector.load %arg18[%c0_46, %c33] : memref<8x546xf32, #tpu.memory_space<vmem>>, vector<8x512xf32>
    %c7 = arith.constant 7 : index
    %c0_47 = arith.constant 0 : index
    %c0_48 = arith.constant 0 : index
    %72 = vector.load %arg2[%c7, %c0_47, %c0_48] : memref<9x1x512xf32, #tpu.memory_space<vmem>>, vector<1x1x512xf32>
    %73 = vector.shape_cast %72 : vector<1x1x512xf32> to vector<1x512xf32>
    %74 = vector.broadcast %73 : vector<1x512xf32> to vector<8x512xf32>
    %75 = arith.mulf %71, %74 : vector<8x512xf32>
    %c0_49 = arith.constant 0 : index
    %c34 = arith.constant 34 : index
    %76 = vector.load %arg18[%c0_49, %c34] : memref<8x546xf32, #tpu.memory_space<vmem>>, vector<8x512xf32>
    %c8 = arith.constant 8 : index
    %c0_50 = arith.constant 0 : index
    %c0_51 = arith.constant 0 : index
    %77 = vector.load %arg2[%c8, %c0_50, %c0_51] : memref<9x1x512xf32, #tpu.memory_space<vmem>>, vector<1x1x512xf32>
    %78 = vector.shape_cast %77 : vector<1x1x512xf32> to vector<1x512xf32>
    %79 = vector.broadcast %78 : vector<1x512xf32> to vector<8x512xf32>
    %80 = arith.mulf %76, %79 : vector<8x512xf32>
    %81 = tpu.concatenate %40, %45, %50, %55, %60, %65, %70, %75, %80 in 0 : vector<8x512xf32>, vector<8x512xf32>, vector<8x512xf32>, vector<8x512xf32>, vector<8x512xf32>, vector<8x512xf32>, vector<8x512xf32>, vector<8x512xf32>, vector<8x512xf32> -> vector<72x512xf32>
    %c0_52 = arith.constant 0 : index
    %c0_53 = arith.constant 0 : index
    %82 = vector.load %arg5[%c0_52, %c0_53] : memref<8x72xbf16, #tpu.memory_space<vmem>>, vector<8x72xbf16>
    %83 = arith.truncf %81 : vector<72x512xf32> to vector<72x512xbf16>
    %cst_54 = arith.constant dense<0.000000e+00> : vector<8x512xf32>
    %84 = tpu.matmul %82, %83, %cst_54 {dimension_numbers = #tpu.dot_dimension_numbers<[1], [0], [0], [1], [0, 0, 1, 1], [], []>} : vector<8x72xbf16>, vector<72x512xbf16>, vector<8x512xf32> -> vector<8x512xf32>
    %c0_55 = arith.constant 0 : index
    %c0_56 = arith.constant 0 : index
    %85 = vector.load %arg10[%c0_55, %c0_56] : memref<8x1xf32, #tpu.memory_space<vmem>>, vector<8x1xf32>
    %c0_57 = arith.constant 0 : index
    %c0_58 = arith.constant 0 : index
    %86 = vector.load %arg11[%c0_57, %c0_58] : memref<8x1xf32, #tpu.memory_space<vmem>>, vector<8x1xf32>
    %cst_59 = arith.constant dense<0.000000e+00> : vector<8xf32>
    %87 = vector.multi_reduction <add>, %84, %cst_59 [1] : vector<8x512xf32> to vector<8xf32>
    %88 = vector.shape_cast %87 : vector<8xf32> to vector<8x1xf32>
    %89 = arith.mulf %84, %84 : vector<8x512xf32>
    %cst_60 = arith.constant dense<0.000000e+00> : vector<8xf32>
    %90 = vector.multi_reduction <add>, %89, %cst_60 [1] : vector<8x512xf32> to vector<8xf32>
    %91 = vector.shape_cast %90 : vector<8xf32> to vector<8x1xf32>
    %cst_61 = arith.constant 0.001953125 : f32
    %92 = vector.broadcast %cst_61 : f32 to vector<8x1xf32>
    %93 = arith.mulf %88, %92 : vector<8x1xf32>
    %cst_62 = arith.constant 0.001953125 : f32
    %94 = vector.broadcast %cst_62 : f32 to vector<8x1xf32>
    %95 = arith.mulf %91, %94 : vector<8x1xf32>
    %96 = arith.mulf %93, %93 : vector<8x1xf32>
    %97 = arith.subf %95, %96 : vector<8x1xf32>
    %cst_63 = arith.constant 0.000000e+00 : f32
    %98 = vector.broadcast %cst_63 : f32 to vector<8x1xf32>
    %99 = arith.maximumf %97, %98 : vector<8x1xf32>
    %100 = vector.broadcast %93 : vector<8x1xf32> to vector<8x512xf32>
    %101 = arith.subf %84, %100 : vector<8x512xf32>
    %cst_64 = arith.constant 9.99999974E-6 : f32
    %102 = vector.broadcast %cst_64 : f32 to vector<8x1xf32>
    %103 = arith.addf %99, %102 : vector<8x1xf32>
    %104 = math.rsqrt %103 : vector<8x1xf32>
    %105 = vector.broadcast %104 : vector<8x1xf32> to vector<8x512xf32>
    %106 = arith.mulf %101, %105 : vector<8x512xf32>
    %107 = vector.broadcast %85 : vector<8x1xf32> to vector<8x512xf32>
    %108 = arith.mulf %106, %107 : vector<8x512xf32>
    %109 = vector.broadcast %86 : vector<8x1xf32> to vector<8x512xf32>
    %110 = arith.addf %108, %109 : vector<8x512xf32>
    %cst_65 = arith.constant 0.000000e+00 : f32
    %111 = vector.broadcast %cst_65 : f32 to vector<8x512xf32>
    %112 = arith.maximumf %110, %111 : vector<8x512xf32>
    %c0_66 = arith.constant 0 : index
    %c0_67 = arith.constant 0 : index
    %113 = vector.load %arg6[%c0_66, %c0_67] : memref<32x8xbf16, #tpu.memory_space<vmem>>, vector<32x8xbf16>
    %114 = arith.truncf %112 : vector<8x512xf32> to vector<8x512xbf16>
    %cst_68 = arith.constant dense<0.000000e+00> : vector<32x512xf32>
    %115 = tpu.matmul %113, %114, %cst_68 {dimension_numbers = #tpu.dot_dimension_numbers<[1], [0], [0], [1], [0, 0, 1, 1], [], []>} : vector<32x8xbf16>, vector<8x512xbf16>, vector<32x512xf32> -> vector<32x512xf32>
    %c0_69 = arith.constant 0 : index
    %c0_70 = arith.constant 0 : index
    %116 = vector.load %arg12[%c0_69, %c0_70] : memref<32x1xf32, #tpu.memory_space<vmem>>, vector<32x1xf32>
    %c0_71 = arith.constant 0 : index
    %c0_72 = arith.constant 0 : index
    %117 = vector.load %arg13[%c0_71, %c0_72] : memref<32x1xf32, #tpu.memory_space<vmem>>, vector<32x1xf32>
    %cst_73 = arith.constant dense<0.000000e+00> : vector<32xf32>
    %118 = vector.multi_reduction <add>, %115, %cst_73 [1] : vector<32x512xf32> to vector<32xf32>
    %119 = vector.shape_cast %118 : vector<32xf32> to vector<32x1xf32>
    %120 = arith.mulf %115, %115 : vector<32x512xf32>
    %cst_74 = arith.constant dense<0.000000e+00> : vector<32xf32>
    %121 = vector.multi_reduction <add>, %120, %cst_74 [1] : vector<32x512xf32> to vector<32xf32>
    %122 = vector.shape_cast %121 : vector<32xf32> to vector<32x1xf32>
    %cst_75 = arith.constant 0.001953125 : f32
    %123 = vector.broadcast %cst_75 : f32 to vector<32x1xf32>
    %124 = arith.mulf %119, %123 : vector<32x1xf32>
    %cst_76 = arith.constant 0.001953125 : f32
    %125 = vector.broadcast %cst_76 : f32 to vector<32x1xf32>
    %126 = arith.mulf %122, %125 : vector<32x1xf32>
    %127 = arith.mulf %124, %124 : vector<32x1xf32>
    %128 = arith.subf %126, %127 : vector<32x1xf32>
    %cst_77 = arith.constant 0.000000e+00 : f32
    %129 = vector.broadcast %cst_77 : f32 to vector<32x1xf32>
    %130 = arith.maximumf %128, %129 : vector<32x1xf32>
    %131 = vector.broadcast %124 : vector<32x1xf32> to vector<32x512xf32>
    %132 = arith.subf %115, %131 : vector<32x512xf32>
    %cst_78 = arith.constant 9.99999974E-6 : f32
    %133 = vector.broadcast %cst_78 : f32 to vector<32x1xf32>
    %134 = arith.addf %130, %133 : vector<32x1xf32>
    %135 = math.rsqrt %134 : vector<32x1xf32>
    %136 = vector.broadcast %135 : vector<32x1xf32> to vector<32x512xf32>
    %137 = arith.mulf %132, %136 : vector<32x512xf32>
    %138 = vector.broadcast %116 : vector<32x1xf32> to vector<32x512xf32>
    %139 = arith.mulf %137, %138 : vector<32x512xf32>
    %140 = vector.broadcast %117 : vector<32x1xf32> to vector<32x512xf32>
    %141 = arith.addf %139, %140 : vector<32x512xf32>
    %c0_79 = arith.constant 0 : index
    %c0_80 = arith.constant 0 : index
    %142 = vector.load %arg7[%c0_79, %c0_80] : memref<32x8xbf16, #tpu.memory_space<vmem>>, vector<32x8xbf16>
    %c0_81 = arith.constant 0 : index
    %c0_82 = arith.constant 0 : index
    %143 = vector.load %arg1[%c0_81, %c0_82] : memref<8x512xbf16, #tpu.memory_space<vmem>>, vector<8x512xbf16>
    %cst_83 = arith.constant dense<0.000000e+00> : vector<32x512xf32>
    %144 = tpu.matmul %142, %143, %cst_83 {dimension_numbers = #tpu.dot_dimension_numbers<[1], [0], [0], [1], [0, 0, 1, 1], [], []>} : vector<32x8xbf16>, vector<8x512xbf16>, vector<32x512xf32> -> vector<32x512xf32>
    %c0_84 = arith.constant 0 : index
    %c0_85 = arith.constant 0 : index
    %145 = vector.load %arg14[%c0_84, %c0_85] : memref<32x1xf32, #tpu.memory_space<vmem>>, vector<32x1xf32>
    %c0_86 = arith.constant 0 : index
    %c0_87 = arith.constant 0 : index
    %146 = vector.load %arg15[%c0_86, %c0_87] : memref<32x1xf32, #tpu.memory_space<vmem>>, vector<32x1xf32>
    %cst_88 = arith.constant dense<0.000000e+00> : vector<32xf32>
    %147 = vector.multi_reduction <add>, %144, %cst_88 [1] : vector<32x512xf32> to vector<32xf32>
    %148 = vector.shape_cast %147 : vector<32xf32> to vector<32x1xf32>
    %149 = arith.mulf %144, %144 : vector<32x512xf32>
    %cst_89 = arith.constant dense<0.000000e+00> : vector<32xf32>
    %150 = vector.multi_reduction <add>, %149, %cst_89 [1] : vector<32x512xf32> to vector<32xf32>
    %151 = vector.shape_cast %150 : vector<32xf32> to vector<32x1xf32>
    %cst_90 = arith.constant 0.001953125 : f32
    %152 = vector.broadcast %cst_90 : f32 to vector<32x1xf32>
    %153 = arith.mulf %148, %152 : vector<32x1xf32>
    %cst_91 = arith.constant 0.001953125 : f32
    %154 = vector.broadcast %cst_91 : f32 to vector<32x1xf32>
    %155 = arith.mulf %151, %154 : vector<32x1xf32>
    %156 = arith.mulf %153, %153 : vector<32x1xf32>
    %157 = arith.subf %155, %156 : vector<32x1xf32>
    %cst_92 = arith.constant 0.000000e+00 : f32
    %158 = vector.broadcast %cst_92 : f32 to vector<32x1xf32>
    %159 = arith.maximumf %157, %158 : vector<32x1xf32>
    %160 = vector.broadcast %153 : vector<32x1xf32> to vector<32x512xf32>
    %161 = arith.subf %144, %160 : vector<32x512xf32>
    %cst_93 = arith.constant 9.99999974E-6 : f32
    %162 = vector.broadcast %cst_93 : f32 to vector<32x1xf32>
    %163 = arith.addf %159, %162 : vector<32x1xf32>
    %164 = math.rsqrt %163 : vector<32x1xf32>
    %165 = vector.broadcast %164 : vector<32x1xf32> to vector<32x512xf32>
    %166 = arith.mulf %161, %165 : vector<32x512xf32>
    %167 = vector.broadcast %145 : vector<32x1xf32> to vector<32x512xf32>
    %168 = arith.mulf %166, %167 : vector<32x512xf32>
    %169 = vector.broadcast %146 : vector<32x1xf32> to vector<32x512xf32>
    %170 = arith.addf %168, %169 : vector<32x512xf32>
    %c0_94 = arith.constant 0 : index
    %c0_95 = arith.constant 0 : index
    %171 = memref.load %arg16[%c0_94, %c0_95] : memref<1x1xf32, #tpu.memory_space<smem>>
    %cst_96 = arith.constant 0.000000e+00 : f32
    %172 = vector.broadcast %cst_96 : f32 to vector<32x512xf32>
    %173 = arith.maximumf %141, %172 : vector<32x512xf32>
    %174 = vector.broadcast %171 : f32 to vector<32x512xf32>
    %175 = arith.mulf %174, %173 : vector<32x512xf32>
    %176 = arith.addf %170, %175 : vector<32x512xf32>
    %c0_97 = arith.constant 0 : index
    %c0_98 = arith.constant 0 : index
    %177 = vector.load %arg17[%c0_97, %c0_98] : memref<32x512xf32, #tpu.memory_space<vmem>>, vector<32x512xf32>
    tpu.vector_store %arg17[%c0_97, %c0_98], %176 {strides = array<i32>} : memref<32x512xf32, #tpu.memory_space<vmem>>, vector<32x512xf32>,
    return
  }
}

</mosaic_0001>

<llo_original>
// kernel: tpu_custom_call.1
$region0: #{tpu_custom_call.1}
  #allocation0 [shape = 'u32[]', space=smem, size = 0x4, offset = 0x4, fixed_abs, tag = 'smem constant byte address 0x4 - core index']
  #allocation1 [shape = 'u32[144,128]{1,0:T(1,128)}', space=vmem, size = 0x12000, scoped, tag = 'internal scratch']
  #allocation2 [shape = 'f32[8,546]{1,0:T(8,128)}', space=vmem, size = 0x5000, scoped, tag = 'scratch operand']
  #allocation3 [shape = 'f32[1,1]{1,0:T(1,128)S(6)}', space=smem, size = 0x200, scoped, tag = 'scoped memory for tpu_custom_call.1']
  %s0 = inlined_call_operand.vmem [shape: bf16[8,512], index: 0, kind: input, shape index: {}]
  %s1 = inlined_call_operand.vmem [shape: bf16[8,512], index: 1, kind: input, shape index: {}]
  %s2 = inlined_call_operand.vmem [shape: f32[9,1,512], index: 2, kind: input, shape index: {}]
  %s3 = inlined_call_operand.vmem [shape: f32[8,128], index: 3, kind: input, shape index: {}]
  %s4 = inlined_call_operand.vmem [shape: bf16[8,8], index: 4, kind: input, shape index: {}]
  %s5 = inlined_call_operand.vmem [shape: bf16[8,72], index: 5, kind: input, shape index: {}]
  %s6 = inlined_call_operand.vmem [shape: bf16[32,8], index: 6, kind: input, shape index: {}]
  %s7 = inlined_call_operand.vmem [shape: bf16[32,8], index: 7, kind: input, shape index: {}]
  %s8 = inlined_call_operand.vmem [shape: f32[8,1], index: 8, kind: input, shape index: {}]
  %s9 = inlined_call_operand.vmem [shape: f32[8,1], index: 9, kind: input, shape index: {}]
  %s10 = inlined_call_operand.vmem [shape: f32[8,1], index: 10, kind: input, shape index: {}]
  %s11 = inlined_call_operand.vmem [shape: f32[8,1], index: 11, kind: input, shape index: {}]
  %s12 = inlined_call_operand.vmem [shape: f32[32,1], index: 12, kind: input, shape index: {}]
  %s13 = inlined_call_operand.vmem [shape: f32[32,1], index: 13, kind: input, shape index: {}]
  %s14 = inlined_call_operand.vmem [shape: f32[32,1], index: 14, kind: input, shape index: {}]
  %s15 = inlined_call_operand.vmem [shape: f32[32,1], index: 15, kind: input, shape index: {}]
  %s16 = inlined_call_operand.<no memory space> [shape: f32[1,1], index: 16, kind: input, shape index: {}]
  %s17 = inlined_call_operand.hbm [shape: f32[32,512], index: 17, kind: output, shape index: {}]
  %s18 = sld [smem:[#allocation0]]
  $region78: #{tpu_custom_call.1} parent=0
    _
  %s20 = ssub.s32 1, %s18
  %s21 = scalar_select 0, %s20, %s18
  %22 = sst [smem:[#allocation3]] %s16
  $region1: #{tpu_custom_call.1} parent=0
    #allocation4 [shape = 'u8[65536]{0}', space=vmem, size = 0x10000, scoped, tag = 'output window, operand 0, single buffered']
    #allocation5 [shape = 's32[1]{0}', space=sflag, size = 0x4, scoped, tag = 'scoped memory for tpu_custom_call.1']
    %23 = vsyncpa [#allocation5], 0
    // Predicated region
    $region2: #{tpu_custom_call.1} parent=1 // pred_check
      _
    $region3: #{tpu_custom_call.1} parent=1 // pred_check_branch
      %25 = sbr.rel (0) target = $region5
    $region4: #{tpu_custom_call.1} parent=1 // pred_region
      _
    $region5: #{tpu_custom_call.1} parent=1 // pred_fallthru
      _
    // Predicated region
    $region6: #{tpu_custom_call.1} parent=1 // pred_check
      _
    $region7: #{tpu_custom_call.1} parent=1 // pred_check_branch
      %27 = sbr.rel (0) target = $region9
    $region8: #{tpu_custom_call.1} parent=1 // pred_region
      _
    $region9: #{tpu_custom_call.1} parent=1 // pred_fallthru
      _
    // Predicated region
    $region10: #{tpu_custom_call.1} parent=1 // pred_check
      _
    $region11: #{tpu_custom_call.1} parent=1 // pred_check_branch
      %29 = sbr.rel (0) target = $region13
    $region12: #{tpu_custom_call.1} parent=1 // pred_region
      _
    $region13: #{tpu_custom_call.1} parent=1 // pred_fallthru
      _
    // Predicated region
    $region14: #{tpu_custom_call.1} parent=1 // pred_check
      _
    $region15: #{tpu_custom_call.1} parent=1 // pred_check_branch
      %31 = sbr.rel (0) target = $region17
    $region16: #{tpu_custom_call.1} parent=1 // pred_region
      _
    $region17: #{tpu_custom_call.1} parent=1 // pred_fallthru
      _
    // Predicated region
    $region18: #{tpu_custom_call.1} parent=1 // pred_check
      _
    $region19: #{tpu_custom_call.1} parent=1 // pred_check_branch
      %33 = sbr.rel (0) target = $region21
    $region20: #{tpu_custom_call.1} parent=1 // pred_region
      _
    $region21: #{tpu_custom_call.1} parent=1 // pred_fallthru
      _
    // Predicated region
    $region22: #{tpu_custom_call.1} parent=1 // pred_check
      _
    $region23: #{tpu_custom_call.1} parent=1 // pred_check_branch
      %35 = sbr.rel (0) target = $region25
    $region24: #{tpu_custom_call.1} parent=1 // pred_region
      _
    $region25: #{tpu_custom_call.1} parent=1 // pred_fallthru
      _
    // Predicated region
    $region26: #{tpu_custom_call.1} parent=1 // pred_check
      _
    $region27: #{tpu_custom_call.1} parent=1 // pred_check_branch
      %37 = sbr.rel (0) target = $region29
    $region28: #{tpu_custom_call.1} parent=1 // pred_region
      _
    $region29: #{tpu_custom_call.1} parent=1 // pred_fallthru
      _
    // Predicated region
    $region30: #{tpu_custom_call.1} parent=1 // pred_check
      _
    $region31: #{tpu_custom_call.1} parent=1 // pred_check_branch
      %39 = sbr.rel (0) target = $region33
    $region32: #{tpu_custom_call.1} parent=1 // pred_region
      _
    $region33: #{tpu_custom_call.1} parent=1 // pred_fallthru
      _
    // Predicated region
    $region34: #{tpu_custom_call.1} parent=1 // pred_check
      _
    $region35: #{tpu_custom_call.1} parent=1 // pred_check_branch
      %41 = sbr.rel (0) target = $region37
    $region36: #{tpu_custom_call.1} parent=1 // pred_region
      _
    $region37: #{tpu_custom_call.1} parent=1 // pred_fallthru
      _
    // Predicated region
    $region38: #{tpu_custom_call.1} parent=1 // pred_check
      _
    $region39: #{tpu_custom_call.1} parent=1 // pred_check_branch
      %43 = sbr.rel (0) target = $region41
    $region40: #{tpu_custom_call.1} parent=1 // pred_region
      _
    $region41: #{tpu_custom_call.1} parent=1 // pred_fallthru
      _
    // Predicated region
    $region42: #{tpu_custom_call.1} parent=1 // pred_check
      _
    $region43: #{tpu_custom_call.1} parent=1 // pred_check_branch
      %45 = sbr.rel (0) target = $region45
    $region44: #{tpu_custom_call.1} parent=1 // pred_region
      _
    $region45: #{tpu_custom_call.1} parent=1 // pred_fallthru
      _
    // Predicated region
    $region46: #{tpu_custom_call.1} parent=1 // pred_check
      _
    $region47: #{tpu_custom_call.1} parent=1 // pred_check_branch
      %47 = sbr.rel (0) target = $region49
    $region48: #{tpu_custom_call.1} parent=1 // pred_region
      _
    $region49: #{tpu_custom_call.1} parent=1 // pred_fallthru
      _
    // Predicated region
    $region50: #{tpu_custom_call.1} parent=1 // pred_check
      _
    $region51: #{tpu_custom_call.1} parent=1 // pred_check_branch
      %49 = sbr.rel (0) target = $region53
    $region52: #{tpu_custom_call.1} parent=1 // pred_region
      _
    $region53: #{tpu_custom_call.1} parent=1 // pred_fallthru
      _
    // Predicated region
    $region54: #{tpu_custom_call.1} parent=1 // pred_check
      _
    $region55: #{tpu_custom_call.1} parent=1 // pred_check_branch
      %51 = sbr.rel (0) target = $region57
    $region56: #{tpu_custom_call.1} parent=1 // pred_region
      _
    $region57: #{tpu_custom_call.1} parent=1 // pred_fallthru
      _
    // Predicated region
    $region58: #{tpu_custom_call.1} parent=1 // pred_check
      _
    $region59: #{tpu_custom_call.1} parent=1 // pred_check_branch
      %53 = sbr.rel (0) target = $region61
    $region60: #{tpu_custom_call.1} parent=1 // pred_region
      _
    $region61: #{tpu_custom_call.1} parent=1 // pred_fallthru
      _
    // Predicated region
    $region62: #{tpu_custom_call.1} parent=1 // pred_check
      _
    $region63: #{tpu_custom_call.1} parent=1 // pred_check_branch
      %55 = sbr.rel (0) target = $region65
    $region64: #{tpu_custom_call.1} parent=1 // pred_region
      _
    $region65: #{tpu_custom_call.1} parent=1 // pred_fallthru
      _
    // Predicated region
    $region66: #{tpu_custom_call.1} parent=1 // pred_check
      _
    $region67: #{tpu_custom_call.1} parent=1 // pred_check_branch
      %57 = sbr.rel (0) target = $region69
    $region68: #{tpu_custom_call.1} parent=1 // pred_region
      _
    $region69: #{tpu_custom_call.1} parent=1 // pred_fallthru
      _
    %v59 = vld [vmem:[%s4] sm:$0xf]
    %v60 = vld [vmem:[%s0] sm:$0xff]
    %v61 = vld [vmem:[%s0 + $0x8] sm:$0xff]
    %v64 = vunpack.c.l.b16 %v60
    %v65 = vunpack.c.h.b16 %v60
    %v66 = vunpack.c.l.b16 %v61
    %v67 = vunpack.c.h.b16 %v61
    %v68 = vpack.c.b16 %v64, %v64
    %v69 = vpack.c.b16 %v65, %v65
    %v70 = vpack.c.b16 %v66, %v66
    %v71 = vpack.c.b16 %v67, %v67
    %vm72 = vcmask 64512
    %v74 = vsel %vm72, %v59, 0
    %vm76 = vcmask 1043456
    %v78 = vsel %vm76, %v68, 0
    %v81 = vsel %vm76, %v69, 0
    %v84 = vsel %vm76, %v70, 0
    %v87 = vsel %vm76, %v71, 0
    %89 = vmatprep.subr.bf16.mxu0 %v81
    %90 = vmatpush1.bf16.msra.mxu0 %v78
    %91 = vmatprep.subr.bf16.mxu0 0
    %92 = vmatpush1.bf16.msra.mxu0 0
    %93 = vmatprep.subr.bf16.mxu0 0
    %94 = vmatpush1.bf16.msra.mxu0 0
    %95 = vmatprep.subr.bf16.mxu0 0
    %96 = vmatpush1.bf16.msra.mxu0 0
    %97 = vmatprep.subr.bf16.mxu0 0
    %98 = vmatpush1.bf16.msra.mxu0 0
    %99 = vmatprep.subr.bf16.mxu0 0
    %100 = vmatpush1.bf16.msra.mxu0 0
    %101 = vmatprep.subr.bf16.mxu0 0
    %102 = vmatpush1.bf16.msra.mxu0 0
    %103 = vmatprep.subr.bf16.mxu0 0
    %104 = vmatpush1.bf16.msra.mxu0 0
    %105 = vmatprep.subr.bf16.mxu0 0
    %106 = vmatpush1.bf16.msra.mxu0 0
    %107 = vmatprep.subr.bf16.mxu0 0
    %108 = vmatpush1.bf16.msra.mxu0 0
    %109 = vmatprep.subr.bf16.mxu0 0
    %110 = vmatpush1.bf16.msra.mxu0 0
    %111 = vmatprep.subr.bf16.mxu0 0
    %112 = vmatpush1.bf16.msra.mxu0 0
    %113 = vmatprep.subr.bf16.mxu0 0
    %114 = vmatpush1.bf16.msra.mxu0 0
    %115 = vmatprep.subr.bf16.mxu0 0
    %116 = vmatpush1.bf16.msra.mxu0 0
    %117 = vmatprep.subr.bf16.mxu0 0
    %118 = vmatpush1.bf16.msra.mxu0 0
    %119 = vmatprep.subr.bf16.mxu0 0
    %120 = vmatpush1.bf16.msra.mxu0 0
    %121 = vmatprep.mubr.bf16.mxu0 0
    %122 = vmatmul.mubr.bf16.gmra.mrb[0].mxu0 %v74
    %v123 = vpop.f32.mrb[0].mxu0
    %v124 = vadd.f32 0.0, %v123
    %v125 = vpop.f32.mrb[0].mxu0
    %v126 = vadd.f32 0.0, %v125
    %v127 = vpop.f32.mrb[0].mxu0
    %v128 = vpop.f32.mrb[0].mxu0
    %129 = vdwg.mxu0
    %130 = vmatprep.subr.bf16.mxu0 %v87
    %131 = vmatpush1.bf16.msra.mxu0 %v84
    %132 = vmatprep.subr.bf16.mxu0 0
    %133 = vmatpush1.bf16.msra.mxu0 0
    %134 = vmatprep.subr.bf16.mxu0 0
    %135 = vmatpush1.bf16.msra.mxu0 0
    %136 = vmatprep.subr.bf16.mxu0 0
    %137 = vmatpush1.bf16.msra.mxu0 0
    %138 = vmatprep.subr.bf16.mxu0 0
    %139 = vmatpush1.bf16.msra.mxu0 0
    %140 = vmatprep.subr.bf16.mxu0 0
    %141 = vmatpush1.bf16.msra.mxu0 0
    %142 = vmatprep.subr.bf16.mxu0 0
    %143 = vmatpush1.bf16.msra.mxu0 0
    %144 = vmatprep.subr.bf16.mxu0 0
    %145 = vmatpush1.bf16.msra.mxu0 0
    %146 = vmatprep.subr.bf16.mxu0 0
    %147 = vmatpush1.bf16.msra.mxu0 0
    %148 = vmatprep.subr.bf16.mxu0 0
    %149 = vmatpush1.bf16.msra.mxu0 0
    %150 = vmatprep.subr.bf16.mxu0 0
    %151 = vmatpush1.bf16.msra.mxu0 0
    %152 = vmatprep.subr.bf16.mxu0 0
    %153 = vmatpush1.bf16.msra.mxu0 0
    %154 = vmatprep.subr.bf16.mxu0 0
    %155 = vmatpush1.bf16.msra.mxu0 0
    %156 = vmatprep.subr.bf16.mxu0 0
    %157 = vmatpush1.bf16.msra.mxu0 0
    %158 = vmatprep.subr.bf16.mxu0 0
    %159 = vmatpush1.bf16.msra.mxu0 0
    %160 = vmatprep.subr.bf16.mxu0 0
    %161 = vmatpush1.bf16.msra.mxu0 0
    %162 = vmatprep.mubr.bf16.mxu0 0
    %163 = vmatmul.mubr.bf16.gmra.mrb[0].mxu0 %v74
    %v164 = vpop.f32.mrb[0].mxu0
    %v165 = vadd.f32 0.0, %v164
    %v166 = vpop.f32.mrb[0].mxu0
    %v167 = vadd.f32 0.0, %v166
    %v168 = vpop.f32.mrb[0].mxu0
    %v169 = vpop.f32.mrb[0].mxu0
    %170 = vdwg.mxu0
    %v171 = vld [vmem:[%s8] sm:$0xff]
    %v172 = vld [vmem:[%s9] sm:$0xff]
    %v173 = vadd.f32 %v124, %v126
    %v174 = vadd.f32 %v173, %v165
    %v175 = vadd.f32 %v174, %v167
    %176 = vadd.xlane.f32.xlu0 %v175
    %v177 = vpop.xlane.xlu0 %176
    %v178 = vmul.f32 %v124, %v124
    %v179 = vmul.f32 %v126, %v126
    %v180 = vmul.f32 %v165, %v165
    %v181 = vmul.f32 %v167, %v167
    %v182 = vadd.f32 %v178, %v179
    %v183 = vadd.f32 %v182, %v180
    %v184 = vadd.f32 %v183, %v181
    %185 = vadd.xlane.f32.xlu0 %v184
    %v186 = vpop.xlane.xlu0 %185
    %v187 = vmul.f32 %v177, 0.001953125
    %v188 = vmul.f32 %v186, 0.001953125
    %v189 = vmul.f32 %v187, %v187
    %v190 = vsub.f32 %v188, %v189
    %v191 = vmax.f32 %v190, 0.0
    %v192 = vsub.f32 %v124, %v187
    %v193 = vsub.f32 %v126, %v187
    %v194 = vsub.f32 %v165, %v187
    %v195 = vsub.f32 %v167, %v187
    %v196 = vadd.f32 %v191, 1e-05
    %v197 = vrsqrt.pop %v196
    %v198 = vmul.f32 %v192, %v197
    %v199 = vmul.f32 %v193, %v197
    %v200 = vmul.f32 %v194, %v197
    %v201 = vmul.f32 %v195, %v197
    %203 = vset.pattern.permute.xlu0 0
    %204 = vperm.xlu0 %203, %v171
    %v205 = vpop.permute.xlu0 %204
    %v207 = vmul.f32 %v198, %v205
    %v208 = vmul.f32 %v199, %v205
    %v209 = vmul.f32 %v200, %v205
    %v210 = vmul.f32 %v201, %v205
    %212 = vset.pattern.permute.xlu0 0
    %213 = vperm.xlu0 %212, %v172
    %v214 = vpop.permute.xlu0 %213
    %v216 = vadd.f32 %v207, %v214
    %v217 = vadd.f32 %v208, %v214
    %v218 = vadd.f32 %v209, %v214
    %v219 = vadd.f32 %v210, %v214
    %v220 = vmax.f32 %v216, 0.0
    %v221 = vmax.f32 %v217, 0.0
    %v222 = vmax.f32 %v218, 0.0
    %v223 = vmax.f32 %v219, 0.0
    %vm224 = vcmask 138240
    %225 = vst.msk [vmem:[#allocation2] sm:$0xff] %vm224, 0.0
    %vm226 = vcmask 277640
    %227 = vst.msk [vmem:[#allocation2 + $0x20] sm:$0xff] %vm226, 0.0
    %232 = vrot.lane.b32.xlu0 %v220, 17
    %v233 = vpop.permute.xlu0 %232
    %234 = vrot.lane.b32.xlu0 %v221, 17
    %v235 = vpop.permute.xlu0 %234
    %236 = vrot.lane.b32.xlu0 %v222, 17
    %v237 = vpop.permute.xlu0 %236
    %238 = vrot.lane.b32.xlu0 %v223, 17
    %v239 = vpop.permute.xlu0 %238
    %v240 = vsel %vm224, %v233, %v235
    %v241 = vsel %vm224, %v235, %v237
    %v242 = vsel %vm224, %v237, %v239
    %vm248 = vcmask 1047688
    %249 = vst.msk [vmem:[#allocation2] sm:$0xff] %vm248, %v233
    %250 = vst [vmem:[#allocation2 + $0x8] sm:$0xff] %v240
    %251 = vst [vmem:[#allocation2 + $0x10] sm:$0xff] %v241
    %252 = vst [vmem:[#allocation2 + $0x18] sm:$0xff] %v242
    %253 = vst.msk [vmem:[#allocation2 + $0x20] sm:$0xff] %vm224, %v239
    %v254 = vld [vmem:[#allocation2] sm:$0xff]
    %v255 = vld [vmem:[#allocation2 + $0x8] sm:$0xff]
    %v256 = vld [vmem:[#allocation2 + $0x10] sm:$0xff]
    %v257 = vld [vmem:[#allocation2 + $0x18] sm:$0xff]
    %v258 = vld [vmem:[%s2] sm:$0xf]
    %v260 = vlaneseq
    %v261 = vshrl.u32 %v260, 7
    %v262 = vsub.s32 0, %v261
    %v263 = vrot.slane %v258, %v262
    %v264 = vlaneseq
    %v265 = vshrl.u32 %v264, 7
    %v266 = vsub.s32 1, %v265
    %v267 = vrot.slane %v258, %v266
    %v268 = vlaneseq
    %v269 = vshrl.u32 %v268, 7
    %v270 = vsub.s32 2, %v269
    %v271 = vrot.slane %v258, %v270
    %v272 = vlaneseq
    %v273 = vshrl.u32 %v272, 7
    %v274 = vsub.s32 3, %v273
    %v275 = vrot.slane %v258, %v274
    %v280 = vmul.f32 %v254, %v263
    %v281 = vmul.f32 %v255, %v267
    %v282 = vmul.f32 %v256, %v271
    %v283 = vmul.f32 %v257, %v275
    %v284 = vld [vmem:[#allocation2 + $0x20] sm:$0xff]
    %s285 = scalar_lea.vmem %s2, 4
    %v286 = vld [vmem:[%s285] sm:$0xf]
    %v288 = vlaneseq
    %v289 = vshrl.u32 %v288, 7
    %v290 = vsub.s32 0, %v289
    %v291 = vrot.slane %v286, %v290
    %v292 = vlaneseq
    %v293 = vshrl.u32 %v292, 7
    %v294 = vsub.s32 1, %v293
    %v295 = vrot.slane %v286, %v294
    %v296 = vlaneseq
    %v297 = vshrl.u32 %v296, 7
    %v298 = vsub.s32 2, %v297
    %v299 = vrot.slane %v286, %v298
    %v300 = vlaneseq
    %v301 = vshrl.u32 %v300, 7
    %v302 = vsub.s32 3, %v301
    %v303 = vrot.slane %v286, %v302
    %304 = vrot.lane.b32.xlu0 %v291, 1
    %v305 = vpop.permute.xlu0 %304
    %306 = vrot.lane.b32.xlu0 %v295, 1
    %v307 = vpop.permute.xlu0 %306
    %308 = vrot.lane.b32.xlu0 %v299, 1
    %v309 = vpop.permute.xlu0 %308
    %310 = vrot.lane.b32.xlu0 %v303, 1
    %v311 = vpop.permute.xlu0 %310
    %vm312 = vcmask 7168
    %v313 = vsel %vm312, %v305, %v307
    %v314 = vsel %vm312, %v307, %v309
    %v315 = vsel %vm312, %v309, %v311
    %v321 = vmul.f32 %v254, %v305
    %v322 = vmul.f32 %v255, %v313
    %v323 = vmul.f32 %v256, %v314
    %v324 = vmul.f32 %v257, %v315
    %v325 = vmul.f32 %v284, %v311
    %s326 = scalar_lea.vmem %s2, 8
    %v327 = vld [vmem:[%s326] sm:$0xf]
    %v329 = vlaneseq
    %v330 = vshrl.u32 %v329, 7
    %v331 = vsub.s32 0, %v330
    %v332 = vrot.slane %v327, %v331
    %v333 = vlaneseq
    %v334 = vshrl.u32 %v333, 7
    %v335 = vsub.s32 1, %v334
    %v336 = vrot.slane %v327, %v335
    %v337 = vlaneseq
    %v338 = vshrl.u32 %v337, 7
    %v339 = vsub.s32 2, %v338
    %v340 = vrot.slane %v327, %v339
    %v341 = vlaneseq
    %v342 = vshrl.u32 %v341, 7
    %v343 = vsub.s32 3, %v342
    %v344 = vrot.slane %v327, %v343
    %345 = vrot.lane.b32.xlu0 %v332, 2
    %v346 = vpop.permute.xlu0 %345
    %347 = vrot.lane.b32.xlu0 %v336, 2
    %v348 = vpop.permute.xlu0 %347
    %349 = vrot.lane.b32.xlu0 %v340, 2
    %v350 = vpop.permute.xlu0 %349
    %351 = vrot.lane.b32.xlu0 %v344, 2
    %v352 = vpop.permute.xlu0 %351
    %vm353 = vcmask 15360
    %v354 = vsel %vm353, %v346, %v348
    %v355 = vsel %vm353, %v348, %v350
    %v356 = vsel %vm353, %v350, %v352
    %v362 = vmul.f32 %v254, %v346
    %v363 = vmul.f32 %v255, %v354
    %v364 = vmul.f32 %v256, %v355
    %v365 = vmul.f32 %v257, %v356
    %v366 = vmul.f32 %v284, %v352
    %s367 = scalar_lea.vmem %s2, 12
    %v368 = vld [vmem:[%s367] sm:$0xf]
    %v370 = vlaneseq
    %v371 = vshrl.u32 %v370, 7
    %v372 = vsub.s32 0, %v371
    %v373 = vrot.slane %v368, %v372
    %v374 = vlaneseq
    %v375 = vshrl.u32 %v374, 7
    %v376 = vsub.s32 1, %v375
    %v377 = vrot.slane %v368, %v376
    %v378 = vlaneseq
    %v379 = vshrl.u32 %v378, 7
    %v380 = vsub.s32 2, %v379
    %v381 = vrot.slane %v368, %v380
    %v382 = vlaneseq
    %v383 = vshrl.u32 %v382, 7
    %v384 = vsub.s32 3, %v383
    %v385 = vrot.slane %v368, %v384
    %386 = vrot.lane.b32.xlu0 %v373, 16
    %v387 = vpop.permute.xlu0 %386
    %388 = vrot.lane.b32.xlu0 %v377, 16
    %v389 = vpop.permute.xlu0 %388
    %390 = vrot.lane.b32.xlu0 %v381, 16
    %v391 = vpop.permute.xlu0 %390
    %392 = vrot.lane.b32.xlu0 %v385, 16
    %v393 = vpop.permute.xlu0 %392
    %vm394 = vcmask 130048
    %v395 = vsel %vm394, %v387, %v389
    %v396 = vsel %vm394, %v389, %v391
    %v397 = vsel %vm394, %v391, %v393
    %v403 = vmul.f32 %v254, %v387
    %v404 = vmul.f32 %v255, %v395
    %v405 = vmul.f32 %v256, %v396
    %v406 = vmul.f32 %v257, %v397
    %v407 = vmul.f32 %v284, %v393
    %s408 = scalar_lea.vmem %s2, 16
    %v409 = vld [vmem:[%s408] sm:$0xf]
    %v411 = vlaneseq
    %v412 = vshrl.u32 %v411, 7
    %v413 = vsub.s32 0, %v412
    %v414 = vrot.slane %v409, %v413
    %v415 = vlaneseq
    %v416 = vshrl.u32 %v415, 7
    %v417 = vsub.s32 1, %v416
    %v418 = vrot.slane %v409, %v417
    %v419 = vlaneseq
    %v420 = vshrl.u32 %v419, 7
    %v421 = vsub.s32 2, %v420
    %v422 = vrot.slane %v409, %v421
    %v423 = vlaneseq
    %v424 = vshrl.u32 %v423, 7
    %v425 = vsub.s32 3, %v424
    %v426 = vrot.slane %v409, %v425
    %427 = vrot.lane.b32.xlu0 %v414, 17
    %v428 = vpop.permute.xlu0 %427
    %429 = vrot.lane.b32.xlu0 %v418, 17
    %v430 = vpop.permute.xlu0 %429
    %431 = vrot.lane.b32.xlu0 %v422, 17
    %v432 = vpop.permute.xlu0 %431
    %433 = vrot.lane.b32.xlu0 %v426, 17
    %v434 = vpop.permute.xlu0 %433
    %v435 = vsel %vm224, %v428, %v430
    %v436 = vsel %vm224, %v430, %v432
    %v437 = vsel %vm224, %v432, %v434
    %v443 = vmul.f32 %v254, %v428
    %v444 = vmul.f32 %v255, %v435
    %v445 = vmul.f32 %v256, %v436
    %v446 = vmul.f32 %v257, %v437
    %v447 = vmul.f32 %v284, %v434
    %s448 = scalar_lea.vmem %s2, 20
    %v449 = vld [vmem:[%s448] sm:$0xf]
    %v451 = vlaneseq
    %v452 = vshrl.u32 %v451, 7
    %v453 = vsub.s32 0, %v452
    %v454 = vrot.slane %v449, %v453
    %v455 = vlaneseq
    %v456 = vshrl.u32 %v455, 7
    %v457 = vsub.s32 1, %v456
    %v458 = vrot.slane %v449, %v457
    %v459 = vlaneseq
    %v460 = vshrl.u32 %v459, 7
    %v461 = vsub.s32 2, %v460
    %v462 = vrot.slane %v449, %v461
    %v463 = vlaneseq
    %v464 = vshrl.u32 %v463, 7
    %v465 = vsub.s32 3, %v464
    %v466 = vrot.slane %v449, %v465
    %467 = vrot.lane.b32.xlu0 %v454, 18
    %v468 = vpop.permute.xlu0 %467
    %469 = vrot.lane.b32.xlu0 %v458, 18
    %v470 = vpop.permute.xlu0 %469
    %471 = vrot.lane.b32.xlu0 %v462, 18
    %v472 = vpop.permute.xlu0 %471
    %473 = vrot.lane.b32.xlu0 %v466, 18
    %v474 = vpop.permute.xlu0 %473
    %vm475 = vcmask 146432
    %v476 = vsel %vm475, %v468, %v470
    %v477 = vsel %vm475, %v470, %v472
    %v478 = vsel %vm475, %v472, %v474
    %v484 = vmul.f32 %v254, %v468
    %v485 = vmul.f32 %v255, %v476
    %v486 = vmul.f32 %v256, %v477
    %v487 = vmul.f32 %v257, %v478
    %v488 = vmul.f32 %v284, %v474
    %s489 = scalar_lea.vmem %s2, 24
    %v490 = vld [vmem:[%s489] sm:$0xf]
    %v492 = vlaneseq
    %v493 = vshrl.u32 %v492, 7
    %v494 = vsub.s32 0, %v493
    %v495 = vrot.slane %v490, %v494
    %v496 = vlaneseq
    %v497 = vshrl.u32 %v496, 7
    %v498 = vsub.s32 1, %v497
    %v499 = vrot.slane %v490, %v498
    %v500 = vlaneseq
    %v501 = vshrl.u32 %v500, 7
    %v502 = vsub.s32 2, %v501
    %v503 = vrot.slane %v490, %v502
    %v504 = vlaneseq
    %v505 = vshrl.u32 %v504, 7
    %v506 = vsub.s32 3, %v505
    %v507 = vrot.slane %v490, %v506
    %508 = vrot.lane.b32.xlu0 %v495, 32
    %v509 = vpop.permute.xlu0 %508
    %510 = vrot.lane.b32.xlu0 %v499, 32
    %v511 = vpop.permute.xlu0 %510
    %512 = vrot.lane.b32.xlu0 %v503, 32
    %v513 = vpop.permute.xlu0 %512
    %514 = vrot.lane.b32.xlu0 %v507, 32
    %v515 = vpop.permute.xlu0 %514
    %vm516 = vcmask 261120
    %v517 = vsel %vm516, %v509, %v511
    %v518 = vsel %vm516, %v511, %v513
    %v519 = vsel %vm516, %v513, %v515
    %v525 = vmul.f32 %v254, %v509
    %v526 = vmul.f32 %v255, %v517
    %v527 = vmul.f32 %v256, %v518
    %v528 = vmul.f32 %v257, %v519
    %v529 = vmul.f32 %v284, %v515
    %s530 = scalar_lea.vmem %s2, 28
    %v531 = vld [vmem:[%s530] sm:$0xf]
    %v533 = vlaneseq
    %v534 = vshrl.u32 %v533, 7
    %v535 = vsub.s32 0, %v534
    %v536 = vrot.slane %v531, %v535
    %v537 = vlaneseq
    %v538 = vshrl.u32 %v537, 7
    %v539 = vsub.s32 1, %v538
    %v540 = vrot.slane %v531, %v539
    %v541 = vlaneseq
    %v542 = vshrl.u32 %v541, 7
    %v543 = vsub.s32 2, %v542
    %v544 = vrot.slane %v531, %v543
    %v545 = vlaneseq
    %v546 = vshrl.u32 %v545, 7
    %v547 = vsub.s32 3, %v546
    %v548 = vrot.slane %v531, %v547
    %549 = vrot.lane.b32.xlu0 %v536, 33
    %v550 = vpop.permute.xlu0 %549
    %551 = vrot.lane.b32.xlu0 %v540, 33
    %v552 = vpop.permute.xlu0 %551
    %553 = vrot.lane.b32.xlu0 %v544, 33
    %v554 = vpop.permute.xlu0 %553
    %555 = vrot.lane.b32.xlu0 %v548, 33
    %v556 = vpop.permute.xlu0 %555
    %vm557 = vcmask 269312
    %v558 = vsel %vm557, %v550, %v552
    %v559 = vsel %vm557, %v552, %v554
    %v560 = vsel %vm557, %v554, %v556
    %v566 = vmul.f32 %v254, %v550
    %v567 = vmul.f32 %v255, %v558
    %v568 = vmul.f32 %v256, %v559
    %v569 = vmul.f32 %v257, %v560
    %v570 = vmul.f32 %v284, %v556
    %s571 = scalar_lea.vmem %s2, 32
    %v572 = vld [vmem:[%s571] sm:$0xf]
    %v574 = vlaneseq
    %v575 = vshrl.u32 %v574, 7
    %v576 = vsub.s32 0, %v575
    %v577 = vrot.slane %v572, %v576
    %v578 = vlaneseq
    %v579 = vshrl.u32 %v578, 7
    %v580 = vsub.s32 1, %v579
    %v581 = vrot.slane %v572, %v580
    %v582 = vlaneseq
    %v583 = vshrl.u32 %v582, 7
    %v584 = vsub.s32 2, %v583
    %v585 = vrot.slane %v572, %v584
    %v586 = vlaneseq
    %v587 = vshrl.u32 %v586, 7
    %v588 = vsub.s32 3, %v587
    %v589 = vrot.slane %v572, %v588
    %590 = vrot.lane.b32.xlu0 %v577, 34
    %v591 = vpop.permute.xlu0 %590
    %592 = vrot.lane.b32.xlu0 %v581, 34
    %v593 = vpop.permute.xlu0 %592
    %594 = vrot.lane.b32.xlu0 %v585, 34
    %v595 = vpop.permute.xlu0 %594
    %596 = vrot.lane.b32.xlu0 %v589, 34
    %v597 = vpop.permute.xlu0 %596
    %vm598 = vcmask 277504
    %v599 = vsel %vm598, %v591, %v593
    %v600 = vsel %vm598, %v593, %v595
    %v601 = vsel %vm598, %v595, %v597
    %v607 = vmul.f32 %v254, %v591
    %v608 = vmul.f32 %v255, %v599
    %v609 = vmul.f32 %v256, %v600
    %v610 = vmul.f32 %v257, %v601
    %v611 = vmul.f32 %v284, %v597
    %617 = vrot.lane.b32.xlu0 %v321, 127
    %v618 = vpop.permute.xlu0 %617
    %619 = vrot.lane.b32.xlu0 %v322, 127
    %v620 = vpop.permute.xlu0 %619
    %621 = vrot.lane.b32.xlu0 %v323, 127
    %v622 = vpop.permute.xlu0 %621
    %623 = vrot.lane.b32.xlu0 %v324, 127
    %v624 = vpop.permute.xlu0 %623
    %625 = vrot.lane.b32.xlu0 %v325, 127
    %v626 = vpop.permute.xlu0 %625
    %vm627 = vcmask 1039360
    %v628 = vsel %vm627, %v618, %v620
    %v629 = vsel %vm627, %v620, %v622
    %v630 = vsel %vm627, %v622, %v624
    %v631 = vsel %vm627, %v624, %v626
    %641 = vrot.lane.b32.xlu0 %v362, 126
    %v642 = vpop.permute.xlu0 %641
    %643 = vrot.lane.b32.xlu0 %v363, 126
    %v644 = vpop.permute.xlu0 %643
    %645 = vrot.lane.b32.xlu0 %v364, 126
    %v646 = vpop.permute.xlu0 %645
    %647 = vrot.lane.b32.xlu0 %v365, 126
    %v648 = vpop.permute.xlu0 %647
    %649 = vrot.lane.b32.xlu0 %v366, 126
    %v650 = vpop.permute.xlu0 %649
    %vm651 = vcmask 1031168
    %v652 = vsel %vm651, %v642, %v644
    %v653 = vsel %vm651, %v644, %v646
    %v654 = vsel %vm651, %v646, %v648
    %v655 = vsel %vm651, %v648, %v650
    %665 = vrot.lane.b32.xlu0 %v403, 112
    %v666 = vpop.permute.xlu0 %665
    %667 = vrot.lane.b32.xlu0 %v404, 112
    %v668 = vpop.permute.xlu0 %667
    %669 = vrot.lane.b32.xlu0 %v405, 112
    %v670 = vpop.permute.xlu0 %669
    %671 = vrot.lane.b32.xlu0 %v406, 112
    %v672 = vpop.permute.xlu0 %671
    %673 = vrot.lane.b32.xlu0 %v407, 112
    %v674 = vpop.permute.xlu0 %673
    %vm675 = vcmask 916480
    %v676 = vsel %vm675, %v666, %v668
    %v677 = vsel %vm675, %v668, %v670
    %v678 = vsel %vm675, %v670, %v672
    %v679 = vsel %vm675, %v672, %v674
    %689 = vrot.lane.b32.xlu0 %v443, 111
    %v690 = vpop.permute.xlu0 %689
    %691 = vrot.lane.b32.xlu0 %v444, 111
    %v692 = vpop.permute.xlu0 %691
    %693 = vrot.lane.b32.xlu0 %v445, 111
    %v694 = vpop.permute.xlu0 %693
    %695 = vrot.lane.b32.xlu0 %v446, 111
    %v696 = vpop.permute.xlu0 %695
    %697 = vrot.lane.b32.xlu0 %v447, 111
    %v698 = vpop.permute.xlu0 %697
    %vm699 = vcmask 908288
    %v700 = vsel %vm699, %v690, %v692
    %v701 = vsel %vm699, %v692, %v694
    %v702 = vsel %vm699, %v694, %v696
    %v703 = vsel %vm699, %v696, %v698
    %713 = vrot.lane.b32.xlu0 %v484, 110
    %v714 = vpop.permute.xlu0 %713
    %715 = vrot.lane.b32.xlu0 %v485, 110
    %v716 = vpop.permute.xlu0 %715
    %717 = vrot.lane.b32.xlu0 %v486, 110
    %v718 = vpop.permute.xlu0 %717
    %719 = vrot.lane.b32.xlu0 %v487, 110
    %v720 = vpop.permute.xlu0 %719
    %721 = vrot.lane.b32.xlu0 %v488, 110
    %v722 = vpop.permute.xlu0 %721
    %vm723 = vcmask 900096
    %v724 = vsel %vm723, %v714, %v716
    %v725 = vsel %vm723, %v716, %v718
    %v726 = vsel %vm723, %v718, %v720
    %v727 = vsel %vm723, %v720, %v722
    %737 = vrot.lane.b32.xlu0 %v525, 96
    %v738 = vpop.permute.xlu0 %737
    %739 = vrot.lane.b32.xlu0 %v526, 96
    %v740 = vpop.permute.xlu0 %739
    %741 = vrot.lane.b32.xlu0 %v527, 96
    %v742 = vpop.permute.xlu0 %741
    %743 = vrot.lane.b32.xlu0 %v528, 96
    %v744 = vpop.permute.xlu0 %743
    %745 = vrot.lane.b32.xlu0 %v529, 96
    %v746 = vpop.permute.xlu0 %745
    %vm747 = vcmask 785408
    %v748 = vsel %vm747, %v738, %v740
    %v749 = vsel %vm747, %v740, %v742
    %v750 = vsel %vm747, %v742, %v744
    %v751 = vsel %vm747, %v744, %v746
    %761 = vrot.lane.b32.xlu0 %v566, 95
    %v762 = vpop.permute.xlu0 %761
    %763 = vrot.lane.b32.xlu0 %v567, 95
    %v764 = vpop.permute.xlu0 %763
    %765 = vrot.lane.b32.xlu0 %v568, 95
    %v766 = vpop.permute.xlu0 %765
    %767 = vrot.lane.b32.xlu0 %v569, 95
    %v768 = vpop.permute.xlu0 %767
    %769 = vrot.lane.b32.xlu0 %v570, 95
    %v770 = vpop.permute.xlu0 %769
    %vm771 = vcmask 777216
    %v772 = vsel %vm771, %v762, %v764
    %v773 = vsel %vm771, %v764, %v766
    %v774 = vsel %vm771, %v766, %v768
    %v775 = vsel %vm771, %v768, %v770
    %785 = vrot.lane.b32.xlu0 %v607, 94
    %v786 = vpop.permute.xlu0 %785
    %787 = vrot.lane.b32.xlu0 %v608, 94
    %v788 = vpop.permute.xlu0 %787
    %789 = vrot.lane.b32.xlu0 %v609, 94
    %v790 = vpop.permute.xlu0 %789
    %791 = vrot.lane.b32.xlu0 %v610, 94
    %v792 = vpop.permute.xlu0 %791
    %793 = vrot.lane.b32.xlu0 %v611, 94
    %v794 = vpop.permute.xlu0 %793
    %vm795 = vcmask 769024
    %v796 = vsel %vm795, %v786, %v788
    %v797 = vsel %vm795, %v788, %v790
    %v798 = vsel %vm795, %v790, %v792
    %v799 = vsel %vm795, %v792, %v794
    %v804 = vld [vmem:[%s5] sm:$0xf]
    %v805 = vpack.c.bf16 %v628, %v280
    %v806 = vpack.c.bf16 %v629, %v281
    %v807 = vpack.c.bf16 %v630, %v282
    %v808 = vpack.c.bf16 %v631, %v283
    %v809 = vpack.c.bf16 %v676, %v652
    %v810 = vpack.c.bf16 %v677, %v653
    %v811 = vpack.c.bf16 %v678, %v654
    %v812 = vpack.c.bf16 %v679, %v655
    %v813 = vpack.c.bf16 %v724, %v700
    %v814 = vpack.c.bf16 %v725, %v701
    %v815 = vpack.c.bf16 %v726, %v702
    %v816 = vpack.c.bf16 %v727, %v703
    %v817 = vpack.c.bf16 %v772, %v748
    %v818 = vpack.c.bf16 %v773, %v749
    %v819 = vpack.c.bf16 %v774, %v750
    %v820 = vpack.c.bf16 %v775, %v751
    %v821 = vpack.c.bf16 %v796, %v796
    %v822 = vpack.c.bf16 %v797, %v797
    %v823 = vpack.c.bf16 %v798, %v798
    %v824 = vpack.c.bf16 %v799, %v799
    %vm825 = vcmask 588800
    %v827 = vsel %vm825, %v804, 0
    %v830 = vsel %vm76, %v821, 0
    %v833 = vsel %vm76, %v822, 0
    %v836 = vsel %vm76, %v823, 0
    %v839 = vsel %vm76, %v824, 0
    %841 = vmatprep.subr.bf16.mxu0 %v806
    %842 = vmatpush1.bf16.msra.mxu0 %v805
    %843 = vmatprep.subr.bf16.mxu0 %v810
    %844 = vmatpush1.bf16.msra.mxu0 %v809
    %845 = vmatprep.subr.bf16.mxu0 %v814
    %846 = vmatpush1.bf16.msra.mxu0 %v813
    %847 = vmatprep.subr.bf16.mxu0 %v818
    %848 = vmatpush1.bf16.msra.mxu0 %v817
    %849 = vmatprep.subr.bf16.mxu0 %v833
    %850 = vmatpush1.bf16.msra.mxu0 %v830
    %851 = vmatprep.subr.bf16.mxu0 0
    %852 = vmatpush1.bf16.msra.mxu0 0
    %853 = vmatprep.subr.bf16.mxu0 0
    %854 = vmatpush1.bf16.msra.mxu0 0
    %855 = vmatprep.subr.bf16.mxu0 0
    %856 = vmatpush1.bf16.msra.mxu0 0
    %857 = vmatprep.subr.bf16.mxu0 0
    %858 = vmatpush1.bf16.msra.mxu0 0
    %859 = vmatprep.subr.bf16.mxu0 0
    %860 = vmatpush1.bf16.msra.mxu0 0
    %861 = vmatprep.subr.bf16.mxu0 0
    %862 = vmatpush1.bf16.msra.mxu0 0
    %863 = vmatprep.subr.bf16.mxu0 0
    %864 = vmatpush1.bf16.msra.mxu0 0
    %865 = vmatprep.subr.bf16.mxu0 0
    %866 = vmatpush1.bf16.msra.mxu0 0
    %867 = vmatprep.subr.bf16.mxu0 0
    %868 = vmatpush1.bf16.msra.mxu0 0
    %869 = vmatprep.subr.bf16.mxu0 0
    %870 = vmatpush1.bf16.msra.mxu0 0
    %871 = vmatprep.subr.bf16.mxu0 0
    %872 = vmatpush1.bf16.msra.mxu0 0
    %873 = vmatprep.mubr.bf16.mxu0 0
    %874 = vmatmul.mubr.bf16.gmra.mrb[0].mxu0 %v827
    %v875 = vpop.f32.mrb[0].mxu0
    %v876 = vadd.f32 0.0, %v875
    %v877 = vpop.f32.mrb[0].mxu0
    %v878 = vadd.f32 0.0, %v877
    %v879 = vpop.f32.mrb[0].mxu0
    %v880 = vpop.f32.mrb[0].mxu0
    %881 = vdwg.mxu0
    %882 = vmatprep.subr.bf16.mxu0 %v808
    %883 = vmatpush1.bf16.msra.mxu0 %v807
    %884 = vmatprep.subr.bf16.mxu0 %v812
    %885 = vmatpush1.bf16.msra.mxu0 %v811
    %886 = vmatprep.subr.bf16.mxu0 %v816
    %887 = vmatpush1.bf16.msra.mxu0 %v815
    %888 = vmatprep.subr.bf16.mxu0 %v820
    %889 = vmatpush1.bf16.msra.mxu0 %v819
    %890 = vmatprep.subr.bf16.mxu0 %v839
    %891 = vmatpush1.bf16.msra.mxu0 %v836
    %892 = vmatprep.subr.bf16.mxu0 0
    %893 = vmatpush1.bf16.msra.mxu0 0
    %894 = vmatprep.subr.bf16.mxu0 0
    %895 = vmatpush1.bf16.msra.mxu0 0
    %896 = vmatprep.subr.bf16.mxu0 0
    %897 = vmatpush1.bf16.msra.mxu0 0
    %898 = vmatprep.subr.bf16.mxu0 0
    %899 = vmatpush1.bf16.msra.mxu0 0
    %900 = vmatprep.subr.bf16.mxu0 0
    %901 = vmatpush1.bf16.msra.mxu0 0
    %902 = vmatprep.subr.bf16.mxu0 0
    %903 = vmatpush1.bf16.msra.mxu0 0
    %904 = vmatprep.subr.bf16.mxu0 0
    %905 = vmatpush1.bf16.msra.mxu0 0
    %906 = vmatprep.subr.bf16.mxu0 0
    %907 = vmatpush1.bf16.msra.mxu0 0
    %908 = vmatprep.subr.bf16.mxu0 0
    %909 = vmatpush1.bf16.msra.mxu0 0
    %910 = vmatprep.subr.bf16.mxu0 0
    %911 = vmatpush1.bf16.msra.mxu0 0
    %912 = vmatprep.subr.bf16.mxu0 0
    %913 = vmatpush1.bf16.msra.mxu0 0
    %914 = vmatprep.mubr.bf16.mxu0 0
    %915 = vmatmul.mubr.bf16.gmra.mrb[0].mxu0 %v827
    %v916 = vpop.f32.mrb[0].mxu0
    %v917 = vadd.f32 0.0, %v916
    %v918 = vpop.f32.mrb[0].mxu0
    %v919 = vadd.f32 0.0, %v918
    %v920 = vpop.f32.mrb[0].mxu0
    %v921 = vpop.f32.mrb[0].mxu0
    %922 = vdwg.mxu0
    %v923 = vld [vmem:[%s10] sm:$0xff]
    %v924 = vld [vmem:[%s11] sm:$0xff]
    %v925 = vadd.f32 %v876, %v878
    %v926 = vadd.f32 %v925, %v917
    %v927 = vadd.f32 %v926, %v919
    %928 = vadd.xlane.f32.xlu0 %v927
    %v929 = vpop.xlane.xlu0 %928
    %v930 = vmul.f32 %v876, %v876
    %v931 = vmul.f32 %v878, %v878
    %v932 = vmul.f32 %v917, %v917
    %v933 = vmul.f32 %v919, %v919
    %v934 = vadd.f32 %v930, %v931
    %v935 = vadd.f32 %v934, %v932
    %v936 = vadd.f32 %v935, %v933
    %937 = vadd.xlane.f32.xlu0 %v936
    %v938 = vpop.xlane.xlu0 %937
    %v939 = vmul.f32 %v929, 0.001953125
    %v940 = vmul.f32 %v938, 0.001953125
    %v941 = vmul.f32 %v939, %v939
    %v942 = vsub.f32 %v940, %v941
    %v943 = vmax.f32 %v942, 0.0
    %v944 = vsub.f32 %v876, %v939
    %v945 = vsub.f32 %v878, %v939
    %v946 = vsub.f32 %v917, %v939
    %v947 = vsub.f32 %v919, %v939
    %v948 = vadd.f32 %v943, 1e-05
    %v949 = vrsqrt.pop %v948
    %v950 = vmul.f32 %v944, %v949
    %v951 = vmul.f32 %v945, %v949
    %v952 = vmul.f32 %v946, %v949
    %v953 = vmul.f32 %v947, %v949
    %955 = vset.pattern.permute.xlu0 0
    %956 = vperm.xlu0 %955, %v923
    %v957 = vpop.permute.xlu0 %956
    %v959 = vmul.f32 %v950, %v957
    %v960 = vmul.f32 %v951, %v957
    %v961 = vmul.f32 %v952, %v957
    %v962 = vmul.f32 %v953, %v957
    %964 = vset.pattern.permute.xlu0 0
    %965 = vperm.xlu0 %964, %v924
    %v966 = vpop.permute.xlu0 %965
    %v968 = vadd.f32 %v959, %v966
    %v969 = vadd.f32 %v960, %v966
    %v970 = vadd.f32 %v961, %v966
    %v971 = vadd.f32 %v962, %v966
    %v972 = vmax.f32 %v968, 0.0
    %v973 = vmax.f32 %v969, 0.0
    %v974 = vmax.f32 %v970, 0.0
    %v975 = vmax.f32 %v971, 0.0
    %v976 = vld [vmem:[%s6] sm:$0xf]
    %v977 = vld [vmem:[%s6 + $0x4] sm:$0xf]
    %v978 = vld [vmem:[%s6 + $0x8] sm:$0xf]
    %v979 = vld [vmem:[%s6 + $0xc] sm:$0xf]
    %v980 = vpack.c.bf16 %v972, %v972
    %v981 = vpack.c.bf16 %v973, %v973
    %v982 = vpack.c.bf16 %v974, %v974
    %v983 = vpack.c.bf16 %v975, %v975
    %v988 = vunpack.c.l.b16 %v976
    %v989 = vunpack.c.l.b16 %v977
    %v990 = vunpack.c.l.b16 %v978
    %v991 = vunpack.c.l.b16 %v979
    %v992 = vpack.c.b16 %v989, %v988
    %v993 = vpack.c.b16 %v991, %v990
    %v995 = vsel %vm72, %v992, 0
    %v998 = vsel %vm72, %v993, 0
    %v1001 = vsel %vm76, %v980, 0
    %v1004 = vsel %vm76, %v981, 0
    %v1007 = vsel %vm76, %v982, 0
    %v1010 = vsel %vm76, %v983, 0
    %1012 = vmatprep.subr.bf16.mxu0 %v1004
    %1013 = vmatpush1.bf16.msra.mxu0 %v1001
    %1014 = vmatprep.subr.bf16.mxu0 0
    %1015 = vmatpush1.bf16.msra.mxu0 0
    %1016 = vmatprep.subr.bf16.mxu0 0
    %1017 = vmatpush1.bf16.msra.mxu0 0
    %1018 = vmatprep.subr.bf16.mxu0 0
    %1019 = vmatpush1.bf16.msra.mxu0 0
    %1020 = vmatprep.subr.bf16.mxu0 0
    %1021 = vmatpush1.bf16.msra.mxu0 0
    %1022 = vmatprep.subr.bf16.mxu0 0
    %1023 = vmatpush1.bf16.msra.mxu0 0
    %1024 = vmatprep.subr.bf16.mxu0 0
    %1025 = vmatpush1.bf16.msra.mxu0 0
    %1026 = vmatprep.subr.bf16.mxu0 0
    %1027 = vmatpush1.bf16.msra.mxu0 0
    %1028 = vmatprep.subr.bf16.mxu0 0
    %1029 = vmatpush1.bf16.msra.mxu0 0
    %1030 = vmatprep.subr.bf16.mxu0 0
    %1031 = vmatpush1.bf16.msra.mxu0 0
    %1032 = vmatprep.subr.bf16.mxu0 0
    %1033 = vmatpush1.bf16.msra.mxu0 0
    %1034 = vmatprep.subr.bf16.mxu0 0
    %1035 = vmatpush1.bf16.msra.mxu0 0
    %1036 = vmatprep.subr.bf16.mxu0 0
    %1037 = vmatpush1.bf16.msra.mxu0 0
    %1038 = vmatprep.subr.bf16.mxu0 0
    %1039 = vmatpush1.bf16.msra.mxu0 0
    %1040 = vmatprep.subr.bf16.mxu0 0
    %1041 = vmatpush1.bf16.msra.mxu0 0
    %1042 = vmatprep.subr.bf16.mxu0 0
    %1043 = vmatpush1.bf16.msra.mxu0 0
    %1044 = vmatprep.mubr.bf16.mxu0 0
    %1045 = vmatmul.mubr.bf16.gmra.mrb[0].mxu0 %v995
    %v1046 = vpop.f32.mrb[0].mxu0
    %v1047 = vadd.f32 0.0, %v1046
    %v1048 = vpop.f32.mrb[0].mxu0
    %v1049 = vadd.f32 0.0, %v1048
    %v1050 = vpop.f32.mrb[0].mxu0
    %v1051 = vadd.f32 0.0, %v1050
    %v1052 = vpop.f32.mrb[0].mxu0
    %v1053 = vadd.f32 0.0, %v1052
    %1054 = vmatprep.mubr.bf16.mxu0 0
    %1055 = vmatmul.mubr.bf16.gmra.mrb[0].mxu0 %v998
    %v1056 = vpop.f32.mrb[0].mxu0
    %v1057 = vadd.f32 0.0, %v1056
    %v1058 = vpop.f32.mrb[0].mxu0
    %v1059 = vadd.f32 0.0, %v1058
    %v1060 = vpop.f32.mrb[0].mxu0
    %v1061 = vadd.f32 0.0, %v1060
    %v1062 = vpop.f32.mrb[0].mxu0
    %v1063 = vadd.f32 0.0, %v1062
    %1064 = vdwg.mxu0
    %1065 = vmatprep.subr.bf16.mxu0 %v1010
    %1066 = vmatpush1.bf16.msra.mxu0 %v1007
    %1067 = vmatprep.subr.bf16.mxu0 0
    %1068 = vmatpush1.bf16.msra.mxu0 0
    %1069 = vmatprep.subr.bf16.mxu0 0
    %1070 = vmatpush1.bf16.msra.mxu0 0
    %1071 = vmatprep.subr.bf16.mxu0 0
    %1072 = vmatpush1.bf16.msra.mxu0 0
    %1073 = vmatprep.subr.bf16.mxu0 0
    %1074 = vmatpush1.bf16.msra.mxu0 0
    %1075 = vmatprep.subr.bf16.mxu0 0
    %1076 = vmatpush1.bf16.msra.mxu0 0
    %1077 = vmatprep.subr.bf16.mxu0 0
    %1078 = vmatpush1.bf16.msra.mxu0 0
    %1079 = vmatprep.subr.bf16.mxu0 0
    %1080 = vmatpush1.bf16.msra.mxu0 0
    %1081 = vmatprep.subr.bf16.mxu0 0
    %1082 = vmatpush1.bf16.msra.mxu0 0
    %1083 = vmatprep.subr.bf16.mxu0 0
    %1084 = vmatpush1.bf16.msra.mxu0 0
    %1085 = vmatprep.subr.bf16.mxu0 0
    %1086 = vmatpush1.bf16.msra.mxu0 0
    %1087 = vmatprep.subr.bf16.mxu0 0
    %1088 = vmatpush1.bf16.msra.mxu0 0
    %1089 = vmatprep.subr.bf16.mxu0 0
    %1090 = vmatpush1.bf16.msra.mxu0 0
    %1091 = vmatprep.subr.bf16.mxu0 0
    %1092 = vmatpush1.bf16.msra.mxu0 0
    %1093 = vmatprep.subr.bf16.mxu0 0
    %1094 = vmatpush1.bf16.msra.mxu0 0
    %1095 = vmatprep.subr.bf16.mxu0 0
    %1096 = vmatpush1.bf16.msra.mxu0 0
    %1097 = vmatprep.mubr.bf16.mxu0 0
    %1098 = vmatmul.mubr.bf16.gmra.mrb[0].mxu0 %v995
    %v1099 = vpop.f32.mrb[0].mxu0
    %v1100 = vadd.f32 0.0, %v1099
    %v1101 = vpop.f32.mrb[0].mxu0
    %v1102 = vadd.f32 0.0, %v1101
    %v1103 = vpop.f32.mrb[0].mxu0
    %v1104 = vadd.f32 0.0, %v1103
    %v1105 = vpop.f32.mrb[0].mxu0
    %v1106 = vadd.f32 0.0, %v1105
    %1107 = vmatprep.mubr.bf16.mxu0 0
    %1108 = vmatmul.mubr.bf16.gmra.mrb[0].mxu0 %v998
    %v1109 = vpop.f32.mrb[0].mxu0
    %v1110 = vadd.f32 0.0, %v1109
    %v1111 = vpop.f32.mrb[0].mxu0
    %v1112 = vadd.f32 0.0, %v1111
    %v1113 = vpop.f32.mrb[0].mxu0
    %v1114 = vadd.f32 0.0, %v1113
    %v1115 = vpop.f32.mrb[0].mxu0
    %v1116 = vadd.f32 0.0, %v1115
    %1117 = vdwg.mxu0
    %v1118 = vld [vmem:[%s12] sm:$0xff]
    %v1119 = vld [vmem:[%s12 + $0x8] sm:$0xff]
    %v1120 = vld [vmem:[%s12 + $0x10] sm:$0xff]
    %v1121 = vld [vmem:[%s12 + $0x18] sm:$0xff]
    %v1122 = vld [vmem:[%s13] sm:$0xff]
    %v1123 = vld [vmem:[%s13 + $0x8] sm:$0xff]
    %v1124 = vld [vmem:[%s13 + $0x10] sm:$0xff]
    %v1125 = vld [vmem:[%s13 + $0x18] sm:$0xff]
    %v1126 = vadd.f32 %v1047, %v1049
    %v1127 = vadd.f32 %v1126, %v1100
    %v1128 = vadd.f32 %v1127, %v1102
    %1129 = vadd.xlane.f32.xlu0 %v1128
    %v1130 = vpop.xlane.xlu0 %1129
    %v1131 = vadd.f32 %v1051, %v1053
    %v1132 = vadd.f32 %v1131, %v1104
    %v1133 = vadd.f32 %v1132, %v1106
    %1134 = vadd.xlane.f32.xlu0 %v1133
    %v1135 = vpop.xlane.xlu0 %1134
    %v1136 = vadd.f32 %v1057, %v1059
    %v1137 = vadd.f32 %v1136, %v1110
    %v1138 = vadd.f32 %v1137, %v1112
    %1139 = vadd.xlane.f32.xlu0 %v1138
    %v1140 = vpop.xlane.xlu0 %1139
    %v1141 = vadd.f32 %v1061, %v1063
    %v1142 = vadd.f32 %v1141, %v1114
    %v1143 = vadd.f32 %v1142, %v1116
    %1144 = vadd.xlane.f32.xlu0 %v1143
    %v1145 = vpop.xlane.xlu0 %1144
    %v1146 = vmul.f32 %v1047, %v1047
    %v1147 = vmul.f32 %v1049, %v1049
    %v1148 = vmul.f32 %v1100, %v1100
    %v1149 = vmul.f32 %v1102, %v1102
    %v1150 = vmul.f32 %v1051, %v1051
    %v1151 = vmul.f32 %v1053, %v1053
    %v1152 = vmul.f32 %v1104, %v1104
    %v1153 = vmul.f32 %v1106, %v1106
    %v1154 = vmul.f32 %v1057, %v1057
    %v1155 = vmul.f32 %v1059, %v1059
    %v1156 = vmul.f32 %v1110, %v1110
    %v1157 = vmul.f32 %v1112, %v1112
    %v1158 = vmul.f32 %v1061, %v1061
    %v1159 = vmul.f32 %v1063, %v1063
    %v1160 = vmul.f32 %v1114, %v1114
    %v1161 = vmul.f32 %v1116, %v1116
    %v1162 = vadd.f32 %v1146, %v1147
    %v1163 = vadd.f32 %v1162, %v1148
    %v1164 = vadd.f32 %v1163, %v1149
    %1165 = vadd.xlane.f32.xlu0 %v1164
    %v1166 = vpop.xlane.xlu0 %1165
    %v1167 = vadd.f32 %v1150, %v1151
    %v1168 = vadd.f32 %v1167, %v1152
    %v1169 = vadd.f32 %v1168, %v1153
    %1170 = vadd.xlane.f32.xlu0 %v1169
    %v1171 = vpop.xlane.xlu0 %1170
    %v1172 = vadd.f32 %v1154, %v1155
    %v1173 = vadd.f32 %v1172, %v1156
    %v1174 = vadd.f32 %v1173, %v1157
    %1175 = vadd.xlane.f32.xlu0 %v1174
    %v1176 = vpop.xlane.xlu0 %1175
    %v1177 = vadd.f32 %v1158, %v1159
    %v1178 = vadd.f32 %v1177, %v1160
    %v1179 = vadd.f32 %v1178, %v1161
    %1180 = vadd.xlane.f32.xlu0 %v1179
    %v1181 = vpop.xlane.xlu0 %1180
    %v1182 = vmul.f32 %v1130, 0.001953125
    %v1183 = vmul.f32 %v1135, 0.001953125
    %v1184 = vmul.f32 %v1140, 0.001953125
    %v1185 = vmul.f32 %v1145, 0.001953125
    %v1186 = vmul.f32 %v1166, 0.001953125
    %v1187 = vmul.f32 %v1171, 0.001953125
    %v1188 = vmul.f32 %v1176, 0.001953125
    %v1189 = vmul.f32 %v1181, 0.001953125
    %v1190 = vmul.f32 %v1182, %v1182
    %v1191 = vmul.f32 %v1183, %v1183
    %v1192 = vmul.f32 %v1184, %v1184
    %v1193 = vmul.f32 %v1185, %v1185
    %v1194 = vsub.f32 %v1186, %v1190
    %v1195 = vsub.f32 %v1187, %v1191
    %v1196 = vsub.f32 %v1188, %v1192
    %v1197 = vsub.f32 %v1189, %v1193
    %v1198 = vmax.f32 %v1194, 0.0
    %v1199 = vmax.f32 %v1195, 0.0
    %v1200 = vmax.f32 %v1196, 0.0
    %v1201 = vmax.f32 %v1197, 0.0
    %v1202 = vsub.f32 %v1047, %v1182
    %v1203 = vsub.f32 %v1049, %v1182
    %v1204 = vsub.f32 %v1100, %v1182
    %v1205 = vsub.f32 %v1102, %v1182
    %v1206 = vsub.f32 %v1051, %v1183
    %v1207 = vsub.f32 %v1053, %v1183
    %v1208 = vsub.f32 %v1104, %v1183
    %v1209 = vsub.f32 %v1106, %v1183
    %v1210 = vsub.f32 %v1057, %v1184
    %v1211 = vsub.f32 %v1059, %v1184
    %v1212 = vsub.f32 %v1110, %v1184
    %v1213 = vsub.f32 %v1112, %v1184
    %v1214 = vsub.f32 %v1061, %v1185
    %v1215 = vsub.f32 %v1063, %v1185
    %v1216 = vsub.f32 %v1114, %v1185
    %v1217 = vsub.f32 %v1116, %v1185
    %v1218 = vadd.f32 %v1198, 1e-05
    %v1219 = vadd.f32 %v1199, 1e-05
    %v1220 = vadd.f32 %v1200, 1e-05
    %v1221 = vadd.f32 %v1201, 1e-05
    %v1222 = vrsqrt.pop %v1218
    %v1223 = vrsqrt.pop %v1219
    %v1224 = vrsqrt.pop %v1220
    %v1225 = vrsqrt.pop %v1221
    %v1226 = vmul.f32 %v1202, %v1222
    %v1227 = vmul.f32 %v1203, %v1222
    %v1228 = vmul.f32 %v1204, %v1222
    %v1229 = vmul.f32 %v1205, %v1222
    %v1230 = vmul.f32 %v1206, %v1223
    %v1231 = vmul.f32 %v1207, %v1223
    %v1232 = vmul.f32 %v1208, %v1223
    %v1233 = vmul.f32 %v1209, %v1223
    %v1234 = vmul.f32 %v1210, %v1224
    %v1235 = vmul.f32 %v1211, %v1224
    %v1236 = vmul.f32 %v1212, %v1224
    %v1237 = vmul.f32 %v1213, %v1224
    %v1238 = vmul.f32 %v1214, %v1225
    %v1239 = vmul.f32 %v1215, %v1225
    %v1240 = vmul.f32 %v1216, %v1225
    %v1241 = vmul.f32 %v1217, %v1225
    %1243 = vset.pattern.permute.xlu0 0
    %1244 = vperm.xlu0 %1243, %v1118
    %v1245 = vpop.permute.xlu0 %1244
    %1248 = vset.pattern.permute.xlu0 0
    %1249 = vperm.xlu0 %1248, %v1119
    %v1250 = vpop.permute.xlu0 %1249
    %1253 = vset.pattern.permute.xlu0 0
    %1254 = vperm.xlu0 %1253, %v1120
    %v1255 = vpop.permute.xlu0 %1254
    %1258 = vset.pattern.permute.xlu0 0
    %1259 = vperm.xlu0 %1258, %v1121
    %v1260 = vpop.permute.xlu0 %1259
    %v1262 = vmul.f32 %v1226, %v1245
    %v1263 = vmul.f32 %v1227, %v1245
    %v1264 = vmul.f32 %v1228, %v1245
    %v1265 = vmul.f32 %v1229, %v1245
    %v1266 = vmul.f32 %v1230, %v1250
    %v1267 = vmul.f32 %v1231, %v1250
    %v1268 = vmul.f32 %v1232, %v1250
    %v1269 = vmul.f32 %v1233, %v1250
    %v1270 = vmul.f32 %v1234, %v1255
    %v1271 = vmul.f32 %v1235, %v1255
    %v1272 = vmul.f32 %v1236, %v1255
    %v1273 = vmul.f32 %v1237, %v1255
    %v1274 = vmul.f32 %v1238, %v1260
    %v1275 = vmul.f32 %v1239, %v1260
    %v1276 = vmul.f32 %v1240, %v1260
    %v1277 = vmul.f32 %v1241, %v1260
    %1279 = vset.pattern.permute.xlu0 0
    %1280 = vperm.xlu0 %1279, %v1122
    %v1281 = vpop.permute.xlu0 %1280
    %1284 = vset.pattern.permute.xlu0 0
    %1285 = vperm.xlu0 %1284, %v1123
    %v1286 = vpop.permute.xlu0 %1285
    %1289 = vset.pattern.permute.xlu0 0
    %1290 = vperm.xlu0 %1289, %v1124
    %v1291 = vpop.permute.xlu0 %1290
    %1294 = vset.pattern.permute.xlu0 0
    %1295 = vperm.xlu0 %1294, %v1125
    %v1296 = vpop.permute.xlu0 %1295
    %v1298 = vadd.f32 %v1262, %v1281
    %v1299 = vadd.f32 %v1263, %v1281
    %v1300 = vadd.f32 %v1264, %v1281
    %v1301 = vadd.f32 %v1265, %v1281
    %v1302 = vadd.f32 %v1266, %v1286
    %v1303 = vadd.f32 %v1267, %v1286
    %v1304 = vadd.f32 %v1268, %v1286
    %v1305 = vadd.f32 %v1269, %v1286
    %v1306 = vadd.f32 %v1270, %v1291
    %v1307 = vadd.f32 %v1271, %v1291
    %v1308 = vadd.f32 %v1272, %v1291
    %v1309 = vadd.f32 %v1273, %v1291
    %v1310 = vadd.f32 %v1274, %v1296
    %v1311 = vadd.f32 %v1275, %v1296
    %v1312 = vadd.f32 %v1276, %v1296
    %v1313 = vadd.f32 %v1277, %v1296
    %v1314 = vld [vmem:[%s7] sm:$0xf]
    %v1315 = vld [vmem:[%s7 + $0x4] sm:$0xf]
    %v1316 = vld [vmem:[%s7 + $0x8] sm:$0xf]
    %v1317 = vld [vmem:[%s7 + $0xc] sm:$0xf]
    %v1318 = vld [vmem:[%s1] sm:$0xff]
    %v1319 = vld [vmem:[%s1 + $0x8] sm:$0xff]
    %v1324 = vunpack.c.l.b16 %v1314
    %v1325 = vunpack.c.l.b16 %v1315
    %v1326 = vunpack.c.l.b16 %v1316
    %v1327 = vunpack.c.l.b16 %v1317
    %v1328 = vpack.c.b16 %v1325, %v1324
    %v1329 = vpack.c.b16 %v1327, %v1326
    %v1332 = vunpack.c.l.b16 %v1318
    %v1333 = vunpack.c.h.b16 %v1318
    %v1334 = vunpack.c.l.b16 %v1319
    %v1335 = vunpack.c.h.b16 %v1319
    %v1336 = vpack.c.b16 %v1332, %v1332
    %v1337 = vpack.c.b16 %v1333, %v1333
    %v1338 = vpack.c.b16 %v1334, %v1334
    %v1339 = vpack.c.b16 %v1335, %v1335
    %v1341 = vsel %vm72, %v1328, 0
    %v1344 = vsel %vm72, %v1329, 0
    %v1347 = vsel %vm76, %v1336, 0
    %v1350 = vsel %vm76, %v1337, 0
    %v1353 = vsel %vm76, %v1338, 0
    %v1356 = vsel %vm76, %v1339, 0
    %1358 = vmatprep.subr.bf16.mxu0 %v1350
    %1359 = vmatpush1.bf16.msra.mxu0 %v1347
    %1360 = vmatprep.subr.bf16.mxu0 0
    %1361 = vmatpush1.bf16.msra.mxu0 0
    %1362 = vmatprep.subr.bf16.mxu0 0
    %1363 = vmatpush1.bf16.msra.mxu0 0
    %1364 = vmatprep.subr.bf16.mxu0 0
    %1365 = vmatpush1.bf16.msra.mxu0 0
    %1366 = vmatprep.subr.bf16.mxu0 0
    %1367 = vmatpush1.bf16.msra.mxu0 0
    %1368 = vmatprep.subr.bf16.mxu0 0
    %1369 = vmatpush1.bf16.msra.mxu0 0
    %1370 = vmatprep.subr.bf16.mxu0 0
    %1371 = vmatpush1.bf16.msra.mxu0 0
    %1372 = vmatprep.subr.bf16.mxu0 0
    %1373 = vmatpush1.bf16.msra.mxu0 0
    %1374 = vmatprep.subr.bf16.mxu0 0
    %1375 = vmatpush1.bf16.msra.mxu0 0
    %1376 = vmatprep.subr.bf16.mxu0 0
    %1377 = vmatpush1.bf16.msra.mxu0 0
    %1378 = vmatprep.subr.bf16.mxu0 0
    %1379 = vmatpush1.bf16.msra.mxu0 0
    %1380 = vmatprep.subr.bf16.mxu0 0
    %1381 = vmatpush1.bf16.msra.mxu0 0
    %1382 = vmatprep.subr.bf16.mxu0 0
    %1383 = vmatpush1.bf16.msra.mxu0 0
    %1384 = vmatprep.subr.bf16.mxu0 0
    %1385 = vmatpush1.bf16.msra.mxu0 0
    %1386 = vmatprep.subr.bf16.mxu0 0
    %1387 = vmatpush1.bf16.msra.mxu0 0
    %1388 = vmatprep.subr.bf16.mxu0 0
    %1389 = vmatpush1.bf16.msra.mxu0 0
    %1390 = vmatprep.mubr.bf16.mxu0 0
    %1391 = vmatmul.mubr.bf16.gmra.mrb[0].mxu0 %v1341
    %v1392 = vpop.f32.mrb[0].mxu0
    %v1393 = vadd.f32 0.0, %v1392
    %v1394 = vpop.f32.mrb[0].mxu0
    %v1395 = vadd.f32 0.0, %v1394
    %v1396 = vpop.f32.mrb[0].mxu0
    %v1397 = vadd.f32 0.0, %v1396
    %v1398 = vpop.f32.mrb[0].mxu0
    %v1399 = vadd.f32 0.0, %v1398
    %1400 = vmatprep.mubr.bf16.mxu0 0
    %1401 = vmatmul.mubr.bf16.gmra.mrb[0].mxu0 %v1344
    %v1402 = vpop.f32.mrb[0].mxu0
    %v1403 = vadd.f32 0.0, %v1402
    %v1404 = vpop.f32.mrb[0].mxu0
    %v1405 = vadd.f32 0.0, %v1404
    %v1406 = vpop.f32.mrb[0].mxu0
    %v1407 = vadd.f32 0.0, %v1406
    %v1408 = vpop.f32.mrb[0].mxu0
    %v1409 = vadd.f32 0.0, %v1408
    %1410 = vdwg.mxu0
    %1411 = vmatprep.subr.bf16.mxu0 %v1356
    %1412 = vmatpush1.bf16.msra.mxu0 %v1353
    %1413 = vmatprep.subr.bf16.mxu0 0
    %1414 = vmatpush1.bf16.msra.mxu0 0
    %1415 = vmatprep.subr.bf16.mxu0 0
    %1416 = vmatpush1.bf16.msra.mxu0 0
    %1417 = vmatprep.subr.bf16.mxu0 0
    %1418 = vmatpush1.bf16.msra.mxu0 0
    %1419 = vmatprep.subr.bf16.mxu0 0
    %1420 = vmatpush1.bf16.msra.mxu0 0
    %1421 = vmatprep.subr.bf16.mxu0 0
    %1422 = vmatpush1.bf16.msra.mxu0 0
    %1423 = vmatprep.subr.bf16.mxu0 0
    %1424 = vmatpush1.bf16.msra.mxu0 0
    %1425 = vmatprep.subr.bf16.mxu0 0
    %1426 = vmatpush1.bf16.msra.mxu0 0
    %1427 = vmatprep.subr.bf16.mxu0 0
    %1428 = vmatpush1.bf16.msra.mxu0 0
    %1429 = vmatprep.subr.bf16.mxu0 0
    %1430 = vmatpush1.bf16.msra.mxu0 0
    %1431 = vmatprep.subr.bf16.mxu0 0
    %1432 = vmatpush1.bf16.msra.mxu0 0
    %1433 = vmatprep.subr.bf16.mxu0 0
    %1434 = vmatpush1.bf16.msra.mxu0 0
    %1435 = vmatprep.subr.bf16.mxu0 0
    %1436 = vmatpush1.bf16.msra.mxu0 0
    %1437 = vmatprep.subr.bf16.mxu0 0
    %1438 = vmatpush1.bf16.msra.mxu0 0
    %1439 = vmatprep.subr.bf16.mxu0 0
    %1440 = vmatpush1.bf16.msra.mxu0 0
    %1441 = vmatprep.subr.bf16.mxu0 0
    %1442 = vmatpush1.bf16.msra.mxu0 0
    %1443 = vmatprep.mubr.bf16.mxu0 0
    %1444 = vmatmul.mubr.bf16.gmra.mrb[0].mxu0 %v1341
    %v1445 = vpop.f32.mrb[0].mxu0
    %v1446 = vadd.f32 0.0, %v1445
    %v1447 = vpop.f32.mrb[0].mxu0
    %v1448 = vadd.f32 0.0, %v1447
    %v1449 = vpop.f32.mrb[0].mxu0
    %v1450 = vadd.f32 0.0, %v1449
    %v1451 = vpop.f32.mrb[0].mxu0
    %v1452 = vadd.f32 0.0, %v1451
    %1453 = vmatprep.mubr.bf16.mxu0 0
    %1454 = vmatmul.mubr.bf16.gmra.mrb[0].mxu0 %v1344
    %v1455 = vpop.f32.mrb[0].mxu0
    %v1456 = vadd.f32 0.0, %v1455
    %v1457 = vpop.f32.mrb[0].mxu0
    %v1458 = vadd.f32 0.0, %v1457
    %v1459 = vpop.f32.mrb[0].mxu0
    %v1460 = vadd.f32 0.0, %v1459
    %v1461 = vpop.f32.mrb[0].mxu0
    %v1462 = vadd.f32 0.0, %v1461
    %1463 = vdwg.mxu0
    %v1464 = vld [vmem:[%s14] sm:$0xff]
    %v1465 = vld [vmem:[%s14 + $0x8] sm:$0xff]
    %v1466 = vld [vmem:[%s14 + $0x10] sm:$0xff]
    %v1467 = vld [vmem:[%s14 + $0x18] sm:$0xff]
    %v1468 = vld [vmem:[%s15] sm:$0xff]
    %v1469 = vld [vmem:[%s15 + $0x8] sm:$0xff]
    %v1470 = vld [vmem:[%s15 + $0x10] sm:$0xff]
    %v1471 = vld [vmem:[%s15 + $0x18] sm:$0xff]
    %v1472 = vadd.f32 %v1393, %v1395
    %v1473 = vadd.f32 %v1472, %v1446
    %v1474 = vadd.f32 %v1473, %v1448
    %1475 = vadd.xlane.f32.xlu0 %v1474
    %v1476 = vpop.xlane.xlu0 %1475
    %v1477 = vadd.f32 %v1397, %v1399
    %v1478 = vadd.f32 %v1477, %v1450
    %v1479 = vadd.f32 %v1478, %v1452
    %1480 = vadd.xlane.f32.xlu0 %v1479
    %v1481 = vpop.xlane.xlu0 %1480
    %v1482 = vadd.f32 %v1403, %v1405
    %v1483 = vadd.f32 %v1482, %v1456
    %v1484 = vadd.f32 %v1483, %v1458
    %1485 = vadd.xlane.f32.xlu0 %v1484
    %v1486 = vpop.xlane.xlu0 %1485
    %v1487 = vadd.f32 %v1407, %v1409
    %v1488 = vadd.f32 %v1487, %v1460
    %v1489 = vadd.f32 %v1488, %v1462
    %1490 = vadd.xlane.f32.xlu0 %v1489
    %v1491 = vpop.xlane.xlu0 %1490
    %v1492 = vmul.f32 %v1393, %v1393
    %v1493 = vmul.f32 %v1395, %v1395
    %v1494 = vmul.f32 %v1446, %v1446
    %v1495 = vmul.f32 %v1448, %v1448
    %v1496 = vmul.f32 %v1397, %v1397
    %v1497 = vmul.f32 %v1399, %v1399
    %v1498 = vmul.f32 %v1450, %v1450
    %v1499 = vmul.f32 %v1452, %v1452
    %v1500 = vmul.f32 %v1403, %v1403
    %v1501 = vmul.f32 %v1405, %v1405
    %v1502 = vmul.f32 %v1456, %v1456
    %v1503 = vmul.f32 %v1458, %v1458
    %v1504 = vmul.f32 %v1407, %v1407
    %v1505 = vmul.f32 %v1409, %v1409
    %v1506 = vmul.f32 %v1460, %v1460
    %v1507 = vmul.f32 %v1462, %v1462
    %v1508 = vadd.f32 %v1492, %v1493
    %v1509 = vadd.f32 %v1508, %v1494
    %v1510 = vadd.f32 %v1509, %v1495
    %1511 = vadd.xlane.f32.xlu0 %v1510
    %v1512 = vpop.xlane.xlu0 %1511
    %v1513 = vadd.f32 %v1496, %v1497
    %v1514 = vadd.f32 %v1513, %v1498
    %v1515 = vadd.f32 %v1514, %v1499
    %1516 = vadd.xlane.f32.xlu0 %v1515
    %v1517 = vpop.xlane.xlu0 %1516
    %v1518 = vadd.f32 %v1500, %v1501
    %v1519 = vadd.f32 %v1518, %v1502
    %v1520 = vadd.f32 %v1519, %v1503
    %1521 = vadd.xlane.f32.xlu0 %v1520
    %v1522 = vpop.xlane.xlu0 %1521
    %v1523 = vadd.f32 %v1504, %v1505
    %v1524 = vadd.f32 %v1523, %v1506
    %v1525 = vadd.f32 %v1524, %v1507
    %1526 = vadd.xlane.f32.xlu0 %v1525
    %v1527 = vpop.xlane.xlu0 %1526
    %v1528 = vmul.f32 %v1476, 0.001953125
    %v1529 = vmul.f32 %v1481, 0.001953125
    %v1530 = vmul.f32 %v1486, 0.001953125
    %v1531 = vmul.f32 %v1491, 0.001953125
    %v1532 = vmul.f32 %v1512, 0.001953125
    %v1533 = vmul.f32 %v1517, 0.001953125
    %v1534 = vmul.f32 %v1522, 0.001953125
    %v1535 = vmul.f32 %v1527, 0.001953125
    %v1536 = vmul.f32 %v1528, %v1528
    %v1537 = vmul.f32 %v1529, %v1529
    %v1538 = vmul.f32 %v1530, %v1530
    %v1539 = vmul.f32 %v1531, %v1531
    %v1540 = vsub.f32 %v1532, %v1536
    %v1541 = vsub.f32 %v1533, %v1537
    %v1542 = vsub.f32 %v1534, %v1538
    %v1543 = vsub.f32 %v1535, %v1539
    %v1544 = vmax.f32 %v1540, 0.0
    %v1545 = vmax.f32 %v1541, 0.0
    %v1546 = vmax.f32 %v1542, 0.0
    %v1547 = vmax.f32 %v1543, 0.0
    %v1548 = vsub.f32 %v1393, %v1528
    %v1549 = vsub.f32 %v1395, %v1528
    %v1550 = vsub.f32 %v1446, %v1528
    %v1551 = vsub.f32 %v1448, %v1528
    %v1552 = vsub.f32 %v1397, %v1529
    %v1553 = vsub.f32 %v1399, %v1529
    %v1554 = vsub.f32 %v1450, %v1529
    %v1555 = vsub.f32 %v1452, %v1529
    %v1556 = vsub.f32 %v1403, %v1530
    %v1557 = vsub.f32 %v1405, %v1530
    %v1558 = vsub.f32 %v1456, %v1530
    %v1559 = vsub.f32 %v1458, %v1530
    %v1560 = vsub.f32 %v1407, %v1531
    %v1561 = vsub.f32 %v1409, %v1531
    %v1562 = vsub.f32 %v1460, %v1531
    %v1563 = vsub.f32 %v1462, %v1531
    %v1564 = vadd.f32 %v1544, 1e-05
    %v1565 = vadd.f32 %v1545, 1e-05
    %v1566 = vadd.f32 %v1546, 1e-05
    %v1567 = vadd.f32 %v1547, 1e-05
    %v1568 = vrsqrt.pop %v1564
    %v1569 = vrsqrt.pop %v1565
    %v1570 = vrsqrt.pop %v1566
    %v1571 = vrsqrt.pop %v1567
    %v1572 = vmul.f32 %v1548, %v1568
    %v1573 = vmul.f32 %v1549, %v1568
    %v1574 = vmul.f32 %v1550, %v1568
    %v1575 = vmul.f32 %v1551, %v1568
    %v1576 = vmul.f32 %v1552, %v1569
    %v1577 = vmul.f32 %v1553, %v1569
    %v1578 = vmul.f32 %v1554, %v1569
    %v1579 = vmul.f32 %v1555, %v1569
    %v1580 = vmul.f32 %v1556, %v1570
    %v1581 = vmul.f32 %v1557, %v1570
    %v1582 = vmul.f32 %v1558, %v1570
    %v1583 = vmul.f32 %v1559, %v1570
    %v1584 = vmul.f32 %v1560, %v1571
    %v1585 = vmul.f32 %v1561, %v1571
    %v1586 = vmul.f32 %v1562, %v1571
    %v1587 = vmul.f32 %v1563, %v1571
    %1589 = vset.pattern.permute.xlu0 0
    %1590 = vperm.xlu0 %1589, %v1464
    %v1591 = vpop.permute.xlu0 %1590
    %1594 = vset.pattern.permute.xlu0 0
    %1595 = vperm.xlu0 %1594, %v1465
    %v1596 = vpop.permute.xlu0 %1595
    %1599 = vset.pattern.permute.xlu0 0
    %1600 = vperm.xlu0 %1599, %v1466
    %v1601 = vpop.permute.xlu0 %1600
    %1604 = vset.pattern.permute.xlu0 0
    %1605 = vperm.xlu0 %1604, %v1467
    %v1606 = vpop.permute.xlu0 %1605
    %v1608 = vmul.f32 %v1572, %v1591
    %v1609 = vmul.f32 %v1573, %v1591
    %v1610 = vmul.f32 %v1574, %v1591
    %v1611 = vmul.f32 %v1575, %v1591
    %v1612 = vmul.f32 %v1576, %v1596
    %v1613 = vmul.f32 %v1577, %v1596
    %v1614 = vmul.f32 %v1578, %v1596
    %v1615 = vmul.f32 %v1579, %v1596
    %v1616 = vmul.f32 %v1580, %v1601
    %v1617 = vmul.f32 %v1581, %v1601
    %v1618 = vmul.f32 %v1582, %v1601
    %v1619 = vmul.f32 %v1583, %v1601
    %v1620 = vmul.f32 %v1584, %v1606
    %v1621 = vmul.f32 %v1585, %v1606
    %v1622 = vmul.f32 %v1586, %v1606
    %v1623 = vmul.f32 %v1587, %v1606
    %1625 = vset.pattern.permute.xlu0 0
    %1626 = vperm.xlu0 %1625, %v1468
    %v1627 = vpop.permute.xlu0 %1626
    %1630 = vset.pattern.permute.xlu0 0
    %1631 = vperm.xlu0 %1630, %v1469
    %v1632 = vpop.permute.xlu0 %1631
    %1635 = vset.pattern.permute.xlu0 0
    %1636 = vperm.xlu0 %1635, %v1470
    %v1637 = vpop.permute.xlu0 %1636
    %1640 = vset.pattern.permute.xlu0 0
    %1641 = vperm.xlu0 %1640, %v1471
    %v1642 = vpop.permute.xlu0 %1641
    %v1644 = vadd.f32 %v1608, %v1627
    %v1645 = vadd.f32 %v1609, %v1627
    %v1646 = vadd.f32 %v1610, %v1627
    %v1647 = vadd.f32 %v1611, %v1627
    %v1648 = vadd.f32 %v1612, %v1632
    %v1649 = vadd.f32 %v1613, %v1632
    %v1650 = vadd.f32 %v1614, %v1632
    %v1651 = vadd.f32 %v1615, %v1632
    %v1652 = vadd.f32 %v1616, %v1637
    %v1653 = vadd.f32 %v1617, %v1637
    %v1654 = vadd.f32 %v1618, %v1637
    %v1655 = vadd.f32 %v1619, %v1637
    %v1656 = vadd.f32 %v1620, %v1642
    %v1657 = vadd.f32 %v1621, %v1642
    %v1658 = vadd.f32 %v1622, %v1642
    %v1659 = vadd.f32 %v1623, %v1642
    %s1660 = sld [smem:[#allocation3]]
    %v1661 = vmax.f32 %v1298, 0.0
    %v1662 = vmax.f32 %v1299, 0.0
    %v1663 = vmax.f32 %v1300, 0.0
    %v1664 = vmax.f32 %v1301, 0.0
    %v1665 = vmax.f32 %v1302, 0.0
    %v1666 = vmax.f32 %v1303, 0.0
    %v1667 = vmax.f32 %v1304, 0.0
    %v1668 = vmax.f32 %v1305, 0.0
    %v1669 = vmax.f32 %v1306, 0.0
    %v1670 = vmax.f32 %v1307, 0.0
    %v1671 = vmax.f32 %v1308, 0.0
    %v1672 = vmax.f32 %v1309, 0.0
    %v1673 = vmax.f32 %v1310, 0.0
    %v1674 = vmax.f32 %v1311, 0.0
    %v1675 = vmax.f32 %v1312, 0.0
    %v1676 = vmax.f32 %v1313, 0.0
    %v1677 = vstv %s1660
    %v1678 = vmul.f32 %v1677, %v1661
    %v1679 = vmul.f32 %v1677, %v1662
    %v1680 = vmul.f32 %v1677, %v1663
    %v1681 = vmul.f32 %v1677, %v1664
    %v1682 = vmul.f32 %v1677, %v1665
    %v1683 = vmul.f32 %v1677, %v1666
    %v1684 = vmul.f32 %v1677, %v1667
    %v1685 = vmul.f32 %v1677, %v1668
    %v1686 = vmul.f32 %v1677, %v1669
    %v1687 = vmul.f32 %v1677, %v1670
    %v1688 = vmul.f32 %v1677, %v1671
    %v1689 = vmul.f32 %v1677, %v1672
    %v1690 = vmul.f32 %v1677, %v1673
    %v1691 = vmul.f32 %v1677, %v1674
    %v1692 = vmul.f32 %v1677, %v1675
    %v1693 = vmul.f32 %v1677, %v1676
    %v1694 = vadd.f32 %v1644, %v1678
    %v1695 = vadd.f32 %v1645, %v1679
    %v1696 = vadd.f32 %v1646, %v1680
    %v1697 = vadd.f32 %v1647, %v1681
    %v1698 = vadd.f32 %v1648, %v1682
    %v1699 = vadd.f32 %v1649, %v1683
    %v1700 = vadd.f32 %v1650, %v1684
    %v1701 = vadd.f32 %v1651, %v1685
    %v1702 = vadd.f32 %v1652, %v1686
    %v1703 = vadd.f32 %v1653, %v1687
    %v1704 = vadd.f32 %v1654, %v1688
    %v1705 = vadd.f32 %v1655, %v1689
    %v1706 = vadd.f32 %v1656, %v1690
    %v1707 = vadd.f32 %v1657, %v1691
    %v1708 = vadd.f32 %v1658, %v1692
    %v1709 = vadd.f32 %v1659, %v1693
    %1710 = vst [vmem:[#allocation4] sm:$0xff] %v1694
    %1711 = vst [vmem:[#allocation4 + $0x8] sm:$0xff] %v1695
    %1712 = vst [vmem:[#allocation4 + $0x10] sm:$0xff] %v1696
    %1713 = vst [vmem:[#allocation4 + $0x18] sm:$0xff] %v1697
    %1714 = vst [vmem:[#allocation4 + $0x20] sm:$0xff] %v1698
    %1715 = vst [vmem:[#allocation4 + $0x28] sm:$0xff] %v1699
    %1716 = vst [vmem:[#allocation4 + $0x30] sm:$0xff] %v1700
    %1717 = vst [vmem:[#allocation4 + $0x38] sm:$0xff] %v1701
    %1718 = vst [vmem:[#allocation4 + $0x40] sm:$0xff] %v1702
    %1719 = vst [vmem:[#allocation4 + $0x48] sm:$0xff] %v1703
    %1720 = vst [vmem:[#allocation4 + $0x50] sm:$0xff] %v1704
    %1721 = vst [vmem:[#allocation4 + $0x58] sm:$0xff] %v1705
    %1722 = vst [vmem:[#allocation4 + $0x60] sm:$0xff] %v1706
    %1723 = vst [vmem:[#allocation4 + $0x68] sm:$0xff] %v1707
    %1724 = vst [vmem:[#allocation4 + $0x70] sm:$0xff] %v1708
    %1725 = vst [vmem:[#allocation4 + $0x78] sm:$0xff] %v1709
    // Predicated region
    $region70: #{tpu_custom_call.1} parent=1 // pred_check
      _
    $region71: #{tpu_custom_call.1} parent=1 // pred_check_branch
      %1727 = sbr.rel (0) target = $region73
    $region72: #{tpu_custom_call.1} parent=1 // pred_region
      %s1729 = ssub.s32 2048, 2048
      %1730 = vsyncadd [#allocation5], %s1729
      %s1731 = sshll.u32 [#allocation4], 4
      %s1732 = int_to_ptr.vmem [resolvable:$true] %s1731
      %1737 = dma.vmem_to_hbm [thread:$0]  %s1732, 2048, %s17, [#allocation5], 512, 512, 32
    $region73: #{tpu_custom_call.1} parent=1 // pred_fallthru
      _
    // Predicated region
    $region74: #{tpu_custom_call.1} parent=1 // pred_check
      _
    $region75: #{tpu_custom_call.1} parent=1 // pred_check_branch
      %1739 = sbr.rel (0) target = $region77
    $region76: #{tpu_custom_call.1} parent=1 // pred_region
      %1740 = dma.done [#allocation5], 2048
    $region77: #{tpu_custom_call.1} parent=1 // pred_fallthru
      _
    %1741 = vsyncpa [#allocation5], 1

</llo_original>
